<compile_context>
chip_gen: v7x
topology: tpu7x:2x2x1
jax: 0.10.0
libtpu: 0.0.40
codegen_flags: <defaults>
</compile_context>

<pallas_src>
import jax
import jax.numpy as jnp
from jax.experimental import pallas as pl
from jax.experimental.pallas import tpu as pltpu


_SUBLANE = 8   # alignment for the stacked up-channel rows in the VMEM buffer


def _interp_matrix_1d(n_in, n_out):
    """Rows 0..n_out-1 of the 2x bilinear upsample matrix (scale_factor=2,
    align_corners=False), i.e. already cropped.  Every row sums to 1 and all
    weights are in {0, 0.25, 0.75, 1.0} -> exact in bf16."""
    j = jnp.arange(n_out, dtype=jnp.float32)
    src = jnp.clip((j + 0.5) / 2.0 - 0.5, 0.0, float(n_in - 1))
    i0 = jnp.floor(src).astype(jnp.int32)
    i1 = jnp.minimum(i0 + 1, n_in - 1)
    frac = src - i0.astype(jnp.float32)
    m = jnp.zeros((n_out, n_in), jnp.float32)
    m = m.at[jnp.arange(n_out), i0].add(1.0 - frac)
    m = m.at[jnp.arange(n_out), i1].add(frac)
    return m


def _vmem_capacity_bytes():
    try:
        return int(pltpu.get_tpu_info().vmem_capacity_bytes)
    except Exception:                       # emulator / unknown chip
        return 64 * 1024 * 1024             # v7x per-core (most restrictive)


def _pick_row_tile(Ho, Wo, per_sp_bytes, vmem_cap, want_split):
    """Output-row tile `tr`.  Constraints: tr | Ho and (tr == Ho or
    (tr % 8 == 0 and (tr*Wo) % 128 == 0)) so every BlockSpec stays
    (8,128)-legal and the flattened spatial tile is lane-dense."""
    divs = [d for d in range(1, Ho + 1) if Ho % d == 0]
    valid = [d for d in divs if d == Ho or (d % 8 == 0 and (d * Wo) % 128 == 0)]
    budget = max(vmem_cap // 4, per_sp_bytes * Wo)     # stay far from the cap
    fit = [d for d in valid if d * Wo * per_sp_bytes <= budget] or [min(valid)]
    tr = max(fit)
    if want_split and tr == Ho:
        smaller = [d for d in fit if d < Ho]
        if smaller:                  # >=2 parallel grid steps (v7x megacore)
            tr = max(smaller)
    return tr


def context_texture(up, main, w_up, b_up, w_main, b_main,
                    out_dtype=jnp.bfloat16):
    """up: (N, Cup, Hu, Wu), main: (N, Cm, H, W)  -- NCHW like PyTorch.
    w_up: (Cm, Cup, 1, 1), w_main: (Cm, Cm, 1, 1), biases: (Cm,).
    Returns NCHW output of shape (N, Cm, min(2*Hu, H), min(2*Wu, W))."""
    N, Cup, Hu, Wu = up.shape
    _, Cm, H, W = main.shape
    Ho, Wo = min(2 * Hu, H), min(2 * Wu, W)
    S = Ho * Wo
    bf16, f32 = jnp.bfloat16, jnp.float32

    # ---- tiny grid-invariant operands (kept f32; cast in-kernel) -----------
    uh_full = _interp_matrix_1d(Hu, Ho)            # (Ho, Hu)
    uwt = _interp_matrix_1d(Wu, Wo).T              # (Wu, Wo)

    cup_pad = max(_SUBLANE, ((Cup + _SUBLANE - 1) // _SUBLANE) * _SUBLANE)
    K = cup_pad + Cm
    wu2 = w_up.reshape(Cm, Cup).astype(f32)
    if cup_pad != Cup:
        wu2 = jnp.pad(wu2, ((0, 0), (0, cup_pad - Cup)))   # zero cols <-> pad rows
    wcat = jnp.concatenate([wu2, w_main.reshape(Cm, Cm).astype(f32)],
                           axis=1).astype(bf16)            # (Cm, K)
    # bias after upsample is exact (bilinear rows sum to 1)
    bias = (b_up + b_main).reshape(Cm, 1).astype(f32)

    # ---- big streamed operand: no wrapper-side crop/cast copy --------------
    if (Ho, Wo) == (H, W):
        main_flat = main.reshape(N, Cm, S)                 # free HBM view
    else:
        # TODO(synk): express the rare crop via BlockSpec windows instead of
        # this one-off wrapper slice (only hit when 2*Hu != H or 2*Wu != W).
        main_flat = main[:, :, :Ho, :Wo].reshape(N, Cm, S)

    out_bytes = jnp.dtype(out_dtype).itemsize
    main_bytes = jnp.dtype(main.dtype).itemsize
    # VMEM bytes per flattened spatial element: double-buffered main-in + out
    # blocks, stacked scratch, and the up-path f32/bf16 temporaries.
    per_sp = 2 * (main_bytes + out_bytes) * Cm + 2 * K + 6 * cup_pad
    tr = _pick_row_tile(Ho, Wo, per_sp, _vmem_capacity_bytes(),
                        want_split=(N == 1))
    tsp = tr * Wo                 # lane-dense: == S or a multiple of 128
    n_sp = Ho // tr

    def kernel(up_ref, main_ref, uwt_ref, uh_ref, wcat_ref, bias_ref,
               out_ref, stack_ref):
        # up_ref   : (Cup, Hu, Wu)  whole image, grid-invariant over j
        #            (re-DMAed only when the batch index changes).
        # main_ref : (Cm, tsp)      lane-dense flattened spatial tile.
        # uwt_ref  : (Wu, Wo) f32,  uh_ref: (tr, Hu) f32 (this tile's rows).
        # wcat_ref : (Cm, K) bf16,  bias_ref: (Cm, 1) f32.
        # out_ref  : (Cm, tsp) out_dtype.   stack_ref: (K, tsp) bf16 scratch.
        up_b = up_ref[...].astype(bf16)                          # (Cup,Hu,Wu)

        # Separable 2x bilinear upsample of the raw up channels, as two
        # batched (b,M,K)@(b,K,N) einsums (no per-channel Python unroll).
        # The interp matrices are tiny, so broadcasting them over Cup is
        # negligible; recomputing the W-pass per spatial tile keeps every
        # grid step independent (both axes stay "parallel").
        uwt_b = jnp.broadcast_to(uwt_ref[...].astype(bf16)[None],
                                 (Cup, Wu, Wo))
        xw = jnp.einsum('chv,cvw->chw', up_b, uwt_b,
                        preferred_element_type=jnp.float32)      # (Cup,Hu,Wo)
        uh_b = jnp.broadcast_to(uh_ref[...].astype(bf16)[None],
                                (Cup, tr, Hu))
        u3 = jnp.einsum('crh,chw->crw', uh_b, xw.astype(bf16),
                        preferred_element_type=jnp.float32)      # (Cup,tr,Wo)

        # Stack [upsampled-up ; main] channel-wise into one VMEM buffer so the
        # two 1x1 convs become a single K-deep MXU matmul.  The (tr,Wo)->tsp
        # flatten touches only the (small) Cup-wide tensor.
        stack_ref[0:Cup, :] = u3.astype(bf16).reshape(Cup, tsp)
        if cup_pad != Cup:       # zero the alignment rows (their weights are 0)
            stack_ref[Cup:cup_pad, :] = jnp.zeros((cup_pad - Cup, tsp), bf16)
        stack_ref[cup_pad:, :] = main_ref[...].astype(bf16)

        acc = jnp.dot(wcat_ref[...], stack_ref[...],
                      preferred_element_type=jnp.float32)        # (Cm, tsp)
        out_ref[...] = (acc + bias_ref[...]).astype(out_ref.dtype)

    # Only raise the scoped-VMEM window when the footprint needs it; cap well
    # below v7x's 64 MiB physical VMEM.
    est_vmem = (per_sp * tsp
                + 2 * 4 * Cup * Hu * Wu            # double-buffered up block
                + 4 * (Cm * K + Wu * Wo + Ho * Hu + Cm))
    cp_kwargs = dict(dimension_semantics=("parallel", "parallel"))
    if est_vmem > 32 * 1024 * 1024:
        cp_kwargs["vmem_limit_bytes"] = int(min(est_vmem * 3 // 2,
                                                48 * 1024 * 1024))

    out = pl.pallas_call(
        kernel,
        out_shape=jax.ShapeDtypeStruct((N, Cm, S), out_dtype),
        grid=(N, n_sp),
        in_specs=[
            pl.BlockSpec((pl.Squeezed(), Cup, Hu, Wu),
                         lambda n, j: (n, 0, 0, 0)),
            pl.BlockSpec((pl.Squeezed(), Cm, tsp), lambda n, j: (n, 0, j)),
            pl.BlockSpec((Wu, Wo), lambda n, j: (0, 0)),
            pl.BlockSpec((tr, Hu), lambda n, j: (j, 0)),
            pl.BlockSpec((Cm, K), lambda n, j: (0, 0)),
            pl.BlockSpec((Cm, 1), lambda n, j: (0, 0)),
        ],
        out_specs=pl.BlockSpec((pl.Squeezed(), Cm, tsp),
                               lambda n, j: (n, 0, j)),
        scratch_shapes=[pltpu.VMEM((K, tsp), bf16)],
        compiler_params=pltpu.CompilerParams(**cp_kwargs),
    )(up, main_flat, uwt, uh_full, wcat, bias)

    return out.reshape(N, Cm, Ho, Wo)              # already NCHW


def context_texture_ref(up, main, w_up, b_up, w_main, b_main):
    """Pure-JAX f32 reference (gather-based bilinear, NCHW), for validation."""
    N, Cup, Hu, Wu = up.shape
    _, Cm, H, W = main.shape
    up_c = jnp.einsum('nchw,oc->nohw', up, w_up.reshape(Cm, Cup)) \
        + b_up[None, :, None, None]
    mn_c = jnp.einsum('nchw,oc->nohw', main, w_main.reshape(Cm, Cm)) \
        + b_main[None, :, None, None]

    def idx(n_in):
        j = jnp.arange(2 * n_in, dtype=jnp.float32)
        src = jnp.clip((j + 0.5) / 2.0 - 0.5, 0.0, float(n_in - 1))
        i0 = jnp.floor(src).astype(jnp.int32)
        i1 = jnp.minimum(i0 + 1, n_in - 1)
        return i0, i1, src - i0.astype(jnp.float32)

    h0, h1, fh = idx(Hu)
    w0, w1, fw = idx(Wu)
    xh = up_c[:, :, h0, :] * (1 - fh)[None, None, :, None] \
        + up_c[:, :, h1, :] * fh[None, None, :, None]
    res = xh[:, :, :, w0] * (1 - fw) + xh[:, :, :, w1] * fw
    Ho, Wo = min(res.shape[2], H), min(res.shape[3], W)
    return res[:, :, :Ho, :Wo] + mn_c[:, :, :Ho, :Wo]


if __name__ == "__main__":
    key = jax.random.PRNGKey(0)
    k1, k2, k3, k4, k5, k6 = jax.random.split(key, 6)

    N, Cup, Cm = 2, 8, 16
    Hu = Wu = 8            # 'up' feature map
    H = W = 16             # 'main' feature map (2x spatial, typical usage)

    up = jax.random.normal(k1, (N, Cup, Hu, Wu), jnp.float32)
    main = jax.random.normal(k2, (N, Cm, H, W), jnp.float32)
    # shapes match nn.Conv2d(..., kernel_size=1) parameters
    w_up = jax.random.normal(k3, (Cm, Cup, 1, 1), jnp.float32) * 0.1
    b_up = jax.random.normal(k4, (Cm,), jnp.float32) * 0.1
    w_main = jax.random.normal(k5, (Cm, Cm, 1, 1), jnp.float32) * 0.1
    b_main = jax.random.normal(k6, (Cm,), jnp.float32) * 0.1

    out = context_texture(up, main, w_up, b_up, w_main, b_main)
    jax.block_until_ready(out)

    ref = context_texture_ref(up, main, w_up, b_up, w_main, b_main)
    assert out.shape == ref.shape, (out.shape, ref.shape)
    # bf16 MXU operands with f32 accumulation and a bf16 output -> bf16-sized
    # tolerance
    err = float(jnp.max(jnp.abs(out.astype(jnp.float32) - ref)))
    assert jnp.allclose(out.astype(jnp.float32), ref, atol=5e-2, rtol=5e-2), err
    print("KERNEL_OK")
</pallas_src>

<mosaic_0001>
module attributes {stable_mosaic.version = 11 : i64} {
  func.func @kernel(%arg0: i32, %arg1: i32, %arg2: memref<1x8x8x8xf32, #tpu.memory_space<vmem>>, %arg3: memref<1x16x256xf32, #tpu.memory_space<vmem>>, %arg4: memref<8x16xf32, #tpu.memory_space<vmem>>, %arg5: memref<16x8xf32, #tpu.memory_space<vmem>>, %arg6: memref<16x24xbf16, #tpu.memory_space<vmem>>, %arg7: memref<16x1xf32, #tpu.memory_space<vmem>>, %arg8: memref<1x16x256xbf16, #tpu.memory_space<vmem>>, %arg9: memref<24x256xbf16, #tpu.memory_space<vmem>>) attributes {dimension_semantics = [#tpu.dimension_semantics<parallel>, #tpu.dimension_semantics<parallel>], iteration_bounds = array<i64: 2, 1>, scalar_prefetch = 0 : i64, scratch_operands = 1 : i64, tpu.core_type = #tpu.core_type<tc>, window_params = [{transform_indices = @transform_0, window_bounds = array<i64: 1, 8, 8, 8>}, {transform_indices = @transform_1, window_bounds = array<i64: 1, 16, 256>}, {pipeline_mode = #tpu.pipeline_mode<synchronous>, transform_indices = @transform_2, window_bounds = array<i64: 8, 16>}, {transform_indices = @transform_3, window_bounds = array<i64: 16, 8>}, {pipeline_mode = #tpu.pipeline_mode<synchronous>, transform_indices = @transform_4, window_bounds = array<i64: 16, 24>}, {pipeline_mode = #tpu.pipeline_mode<synchronous>, transform_indices = @transform_5, window_bounds = array<i64: 16, 1>}, {transform_indices = @transform_6, window_bounds = array<i64: 1, 16, 256>}]} {
    %c0 = arith.constant 0 : index
    %c0_0 = arith.constant 0 : index
    %c0_1 = arith.constant 0 : index
    %c0_2 = arith.constant 0 : index
    %0 = vector.load %arg2[%c0, %c0_0, %c0_1, %c0_2] : memref<1x8x8x8xf32, #tpu.memory_space<vmem>>, vector<1x8x8x8xf32>
    %1 = vector.shape_cast %0 : vector<1x8x8x8xf32> to vector<8x8x8xf32>
    %2 = arith.truncf %1 : vector<8x8x8xf32> to vector<8x8x8xbf16>
    %c0_3 = arith.constant 0 : index
    %c0_4 = arith.constant 0 : index
    %3 = vector.load %arg4[%c0_3, %c0_4] : memref<8x16xf32, #tpu.memory_space<vmem>>, vector<8x16xf32>
    %4 = arith.truncf %3 : vector<8x16xf32> to vector<8x16xbf16>
    %5 = vector.shape_cast %4 : vector<8x16xbf16> to vector<1x8x16xbf16>
    %6 = vector.shape_cast %5 : vector<1x8x16xbf16> to vector<1x8x16xbf16>
    %7 = vector.broadcast %6 : vector<1x8x16xbf16> to vector<8x8x16xbf16>
    "tpu.trace_start"() <{level = 10 : i32, message = "chv,cvw->chw"}> : () -> ()
    %cst = arith.constant dense<0.000000e+00> : vector<8x8x16xf32>
    %8 = tpu.matmul %2, %7, %cst {dimension_numbers = #tpu.dot_dimension_numbers<[2], [1], [1], [2], [0, 0, 0, 1, 1, 2], [0], [0]>} : vector<8x8x8xbf16>, vector<8x8x16xbf16>, vector<8x8x16xf32> -> vector<8x8x16xf32>
    "tpu.trace_stop"() : () -> ()
    %c0_5 = arith.constant 0 : index
    %c0_6 = arith.constant 0 : index
    %9 = vector.load %arg5[%c0_5, %c0_6] : memref<16x8xf32, #tpu.memory_space<vmem>>, vector<16x8xf32>
    %10 = arith.truncf %9 : vector<16x8xf32> to vector<16x8xbf16>
    %11 = vector.shape_cast %10 : vector<16x8xbf16> to vector<1x16x8xbf16>
    %12 = vector.shape_cast %11 : vector<1x16x8xbf16> to vector<1x16x8xbf16>
    %13 = vector.broadcast %12 : vector<1x16x8xbf16> to vector<8x16x8xbf16>
    %14 = arith.truncf %8 : vector<8x8x16xf32> to vector<8x8x16xbf16>
    "tpu.trace_start"() <{level = 10 : i32, message = "crh,chw->crw"}> : () -> ()
    %cst_7 = arith.constant dense<0.000000e+00> : vector<8x16x16xf32>
    %15 = tpu.matmul %13, %14, %cst_7 {dimension_numbers = #tpu.dot_dimension_numbers<[2], [1], [1], [2], [0, 0, 0, 1, 1, 2], [0], [0]>} : vector<8x16x8xbf16>, vector<8x8x16xbf16>, vector<8x16x16xf32> -> vector<8x16x16xf32>
    "tpu.trace_stop"() : () -> ()
    %16 = arith.truncf %15 : vector<8x16x16xf32> to vector<8x16x16xbf16>
    %17 = vector.shape_cast %16 : vector<8x16x16xbf16> to vector<8x256xbf16>
    %c0_8 = arith.constant 0 : index
    %c0_9 = arith.constant 0 : index
    %18 = vector.load %arg9[%c0_8, %c0_9] : memref<24x256xbf16, #tpu.memory_space<vmem>>, vector<8x256xbf16>
    tpu.vector_store %arg9[%c0_8, %c0_9], %17 {strides = array<i32>} : memref<24x256xbf16, #tpu.memory_space<vmem>>, vector<8x256xbf16>,
    %c0_10 = arith.constant 0 : index
    %c0_11 = arith.constant 0 : index
    %c0_12 = arith.constant 0 : index
    %19 = vector.load %arg3[%c0_10, %c0_11, %c0_12] : memref<1x16x256xf32, #tpu.memory_space<vmem>>, vector<1x16x256xf32>
    %20 = vector.shape_cast %19 : vector<1x16x256xf32> to vector<16x256xf32>
    %21 = arith.truncf %20 : vector<16x256xf32> to vector<16x256xbf16>
    %c8 = arith.constant 8 : index
    %c0_13 = arith.constant 0 : index
    %22 = vector.load %arg9[%c8, %c0_13] : memref<24x256xbf16, #tpu.memory_space<vmem>>, vector<16x256xbf16>
    tpu.vector_store %arg9[%c8, %c0_13], %21 {strides = array<i32>} : memref<24x256xbf16, #tpu.memory_space<vmem>>, vector<16x256xbf16>,
    %c0_14 = arith.constant 0 : index
    %c0_15 = arith.constant 0 : index
    %23 = vector.load %arg6[%c0_14, %c0_15] : memref<16x24xbf16, #tpu.memory_space<vmem>>, vector<16x24xbf16>
    %c0_16 = arith.constant 0 : index
    %c0_17 = arith.constant 0 : index
    %24 = vector.load %arg9[%c0_16, %c0_17] : memref<24x256xbf16, #tpu.memory_space<vmem>>, vector<24x256xbf16>
    %cst_18 = arith.constant dense<0.000000e+00> : vector<16x256xf32>
    %25 = tpu.matmul %23, %24, %cst_18 {dimension_numbers = #tpu.dot_dimension_numbers<[1], [0], [0], [1], [0, 0, 1, 1], [], []>} : vector<16x24xbf16>, vector<24x256xbf16>, vector<16x256xf32> -> vector<16x256xf32>
    %c0_19 = arith.constant 0 : index
    %c0_20 = arith.constant 0 : index
    %26 = vector.load %arg7[%c0_19, %c0_20] : memref<16x1xf32, #tpu.memory_space<vmem>>, vector<16x1xf32>
    %27 = vector.broadcast %26 : vector<16x1xf32> to vector<16x256xf32>
    %28 = arith.addf %25, %27 : vector<16x256xf32>
    %29 = arith.truncf %28 : vector<16x256xf32> to vector<16x256xbf16>
    %c0_21 = arith.constant 0 : index
    %c0_22 = arith.constant 0 : index
    %c0_23 = arith.constant 0 : index
    %30 = vector.load %arg8[%c0_21, %c0_22, %c0_23] : memref<1x16x256xbf16, #tpu.memory_space<vmem>>, vector<1x16x256xbf16>
    %31 = vector.shape_cast %30 : vector<1x16x256xbf16> to vector<16x256xbf16>
    %32 = vector.shape_cast %29 : vector<16x256xbf16> to vector<1x16x256xbf16>
    tpu.vector_store %arg8[%c0_21, %c0_22, %c0_23], %32 {strides = array<i32>} : memref<1x16x256xbf16, #tpu.memory_space<vmem>>, vector<1x16x256xbf16>,
    return
  }
  func.func @transform_0(%arg0: i32, %arg1: i32) -> (i32, i32, i32, i32) {
    %c0_i32 = arith.constant 0 : i32
    %c0_i32_0 = arith.constant 0 : i32
    %c0_i32_1 = arith.constant 0 : i32
    %c0_i32_2 = arith.constant 0 : i32
    return %arg0, %c0_i32, %c0_i32_0, %c0_i32_1 : i32, i32, i32, i32
  }
  func.func @transform_1(%arg0: i32, %arg1: i32) -> (i32, i32, i32) {
    %c0_i32 = arith.constant 0 : i32
    %c0_i32_0 = arith.constant 0 : i32
    return %arg0, %c0_i32, %arg1 : i32, i32, i32
  }
  func.func @transform_2(%arg0: i32, %arg1: i32) -> (i32, i32) {
    %c0_i32 = arith.constant 0 : i32
    %c0_i32_0 = arith.constant 0 : i32
    %c0_i32_1 = arith.constant 0 : i32
    return %c0_i32, %c0_i32_0 : i32, i32
  }
  func.func @transform_3(%arg0: i32, %arg1: i32) -> (i32, i32) {
    %c0_i32 = arith.constant 0 : i32
    %c0_i32_0 = arith.constant 0 : i32
    return %arg1, %c0_i32 : i32, i32
  }
  func.func @transform_4(%arg0: i32, %arg1: i32) -> (i32, i32) {
    %c0_i32 = arith.constant 0 : i32
    %c0_i32_0 = arith.constant 0 : i32
    %c0_i32_1 = arith.constant 0 : i32
    return %c0_i32, %c0_i32_0 : i32, i32
  }
  func.func @transform_5(%arg0: i32, %arg1: i32) -> (i32, i32) {
    %c0_i32 = arith.constant 0 : i32
    %c0_i32_0 = arith.constant 0 : i32
    %c0_i32_1 = arith.constant 0 : i32
    return %c0_i32, %c0_i32_0 : i32, i32
  }
  func.func @transform_6(%arg0: i32, %arg1: i32) -> (i32, i32, i32) {
    %c0_i32 = arith.constant 0 : i32
    %c0_i32_0 = arith.constant 0 : i32
    return %arg0, %c0_i32, %arg1 : i32, i32, i32
  }
}

</mosaic_0001>

<llo_original>
// kernel: tpu_custom_call.1
$region0: #{tpu_custom_call.1}
  #allocation0 [shape = 'u32[]', space=smem, size = 0x4, offset = 0x4, fixed_abs, tag = 'smem constant byte address 0x4 - core index']
  #allocation1 [shape = 'u32[144,128]{1,0:T(1,128)}', space=vmem, size = 0x12000, scoped, tag = 'internal scratch']
  #allocation2 [shape = 'bf16[24,256]{1,0:T(8,128)(2,1)}', space=vmem, size = 0x3000, scoped, tag = 'scratch operand']
  %s0 = inlined_call_operand.hbm [shape: f32[2,8,8,8], index: 0, kind: input, shape index: {}]
  %s1 = inlined_call_operand.hbm [shape: f32[2,16,256], index: 1, kind: input, shape index: {}]
  %s2 = inlined_call_operand.vmem [shape: f32[8,16], index: 2, kind: input, shape index: {}]
  %s3 = inlined_call_operand.vmem [shape: f32[16,8], index: 3, kind: input, shape index: {}]
  %s4 = inlined_call_operand.vmem [shape: bf16[16,24], index: 4, kind: input, shape index: {}]
  %s5 = inlined_call_operand.vmem [shape: f32[16,1], index: 5, kind: input, shape index: {}]
  %s6 = inlined_call_operand.hbm [shape: bf16[2,16,256], index: 6, kind: output, shape index: {}]
  %s7 = sld [smem:[#allocation0]]
  $region65: #{tpu_custom_call.1} parent=0
    _
  %s9 = ssub.s32 1, %s7
  %s10 = scalar_select 0, %s9, %s7
  $region1: #{tpu_custom_call.1} parent=0
    #allocation3 [shape = 'u8[65536]{0}', space=vmem, size = 0x10000, scoped, tag = 'input window, operand 0']
    #allocation4 [shape = 's32[2]{0}', space=sflag, size = 0x8, scoped, tag = 'scoped memory for tpu_custom_call.1']
    #allocation5 [shape = 's32[2]{0}', space=sflag, size = 0x8, scoped, tag = 'scoped memory for tpu_custom_call.1']
    #allocation6 [shape = 'u8[32768]{0}', space=vmem, size = 0x8000, scoped, tag = 'input window, operand 1']
    #allocation7 [shape = 's32[2]{0}', space=sflag, size = 0x8, scoped, tag = 'scoped memory for tpu_custom_call.1']
    #allocation8 [shape = 'u8[16384]{0}', space=vmem, size = 0x4000, scoped, tag = 'output window, operand 0']
    %11 = vsyncpa [#allocation4], 0
    %s12 = scalar_lea.sflag [#allocation4], 1
    %13 = vsyncpa %s12, 0
    %14 = vsyncpa [#allocation7], 0
    %s15 = scalar_lea.sflag [#allocation7], 1
    %16 = vsyncpa %s15, 0
    %17 = vsyncpa [#allocation5], 0
    %s18 = scalar_lea.sflag [#allocation5], 1
    %19 = vsyncpa %s18, 0
    loop: start=0, step=1, limit=4
    $region2: #{tpu_custom_call.1} parent=1 // loop_pre_header
      _
    $region3: #{tpu_custom_call.1} parent=1 // loop_header
      %s21 = sphi 0, %s25
      %p22 = scmp.ge.s32.totalorder %s21, 4
      %s28 = sphi 0, %s40
      %s29 = sphi 0, %s36
      %s30 = sphi 0, %s28
      %s31 = sphi 0, %s29
      %s32 = sphi 0, %s30
      %s33 = sphi 0, %s31
      %s43 = sphi 0, %s45
      %s46 = sphi 0, %s43
      %s47 = sphi 0, %s46
      %s63 = sphi 0, %s47
      %s71 = sphi 0, %s73
      %s74 = sphi 0, %s71
      %s75 = sphi 0, %s74
      %s91 = sphi 0, %s75
      %s95 = sphi 0, %s95
      %s97 = sphi 0, %s95
      %s98 = sphi 0, %s97
      %s112 = sphi 0, %s98
      %s118 = sphi 0, %s120
      %s121 = sphi 0, %s118
      %s122 = sphi 0, %s121
      %s138 = sphi 0, %s122
      %s142 = sphi 0, %s142
      %s144 = sphi 0, %s142
      %s145 = sphi 0, %s144
      %s159 = sphi 0, %s145
      %s163 = sphi 0, %s163
      %s165 = sphi 0, %s163
      %s166 = sphi 0, %s165
      %s180 = sphi 0, %s166
      %s188 = sphi 0, %s190
      %s191 = sphi 0, %s188
      %s192 = sphi 0, %s191
      %s208 = sphi 0, %s192
    $region4: #{tpu_custom_call.1} parent=1 // loop_header_branch
      %24 = sbr.rel (%p22) target = $region8
    $region5: #{tpu_custom_call.1} parent=1 // loop_body
      %s26 = ssub.s32 %s21, 1
      %s27 = ssub.s32 %s21, 2
      %s34 = sadd.s32 1, %s29
      %p35 = scmp.ge.s32.totalorder %s34, 1
      %s36 = scalar_select %p35, 0, %s34
      %s37 = sadd.s32 1, %s28
      %s38 = scalar_select %p35, %s37, %s28
      %p39 = scmp.ge.s32.totalorder %s38, 2
      %s40 = scalar_select %p39, 0, %s38
      %s41 = ssub.s32 %s28, %s40
      %p42 = scmp.eq.s32.totalorder %s41, 0
      %s44 = sadd.s32 %s43, 1
      %s45 = scalar_select %p42, %s43, %s44
      %p48 = pneg %p42
      %p49 = scmp.eq.s32.totalorder %s21, 1
      %p50 = por %p48, %p49
      %p51 = scmp.ne.s32.totalorder %s43, %s46
      %p52 = scmp.eq.s32.totalorder %s21, 0
      %p53 = por %p51, %p52
      %p54 = scmp.ne.s32.totalorder %s43, %s46
      %p55 = scmp.eq.s32.totalorder %s26, 1
      %p56 = por %p54, %p55
      %p57 = scmp.ne.s32.totalorder %s46, %s47
      %p58 = scmp.eq.s32.totalorder %s26, 0
      %p59 = por %p57, %p58
      %p60 = scmp.ne.s32.totalorder %s46, %s47
      %p61 = scmp.eq.s32.totalorder %s27, 1
      %p62 = por %p60, %p61
      %p64 = scmp.ne.s32.totalorder %s47, %s63
      %p65 = scmp.eq.s32.totalorder %s27, 0
      %p66 = por %p64, %p65
      %s67 = ssub.s32 %s28, %s40
      %s68 = ssub.s32 %s29, %s36
      %s69 = sor.u32 %s67, %s68
      %p70 = scmp.eq.s32.totalorder %s69, 0
      %s72 = sadd.s32 %s71, 1
      %s73 = scalar_select %p70, %s71, %s72
      %p76 = pneg %p70
      %p77 = scmp.eq.s32.totalorder %s21, 1
      %p78 = por %p76, %p77
      %p79 = scmp.ne.s32.totalorder %s71, %s74
      %p80 = scmp.eq.s32.totalorder %s21, 0
      %p81 = por %p79, %p80
      %p82 = scmp.ne.s32.totalorder %s71, %s74
      %p83 = scmp.eq.s32.totalorder %s26, 1
      %p84 = por %p82, %p83
      %p85 = scmp.ne.s32.totalorder %s74, %s75
      %p86 = scmp.eq.s32.totalorder %s26, 0
      %p87 = por %p85, %p86
      %p88 = scmp.ne.s32.totalorder %s74, %s75
      %p89 = scmp.eq.s32.totalorder %s27, 1
      %p90 = por %p88, %p89
      %p92 = scmp.ne.s32.totalorder %s75, %s91
      %p93 = scmp.eq.s32.totalorder %s27, 0
      %p94 = por %p92, %p93
      %s96 = sadd.s32 %s95, 1
      %p99 = scmp.eq.s32.totalorder %s21, 1
      %p100 = scmp.ne.s32.totalorder %s95, %s97
      %p101 = scmp.eq.s32.totalorder %s21, 0
      %p102 = por %p100, %p101
      %p103 = scmp.ne.s32.totalorder %s95, %s97
      %p104 = scmp.eq.s32.totalorder %s26, 1
      %p105 = por %p103, %p104
      %p106 = scmp.ne.s32.totalorder %s97, %s98
      %p107 = scmp.eq.s32.totalorder %s26, 0
      %p108 = por %p106, %p107
      %p109 = scmp.ne.s32.totalorder %s97, %s98
      %p110 = scmp.eq.s32.totalorder %s27, 1
      %p111 = por %p109, %p110
      %p113 = scmp.ne.s32.totalorder %s98, %s112
      %p114 = scmp.eq.s32.totalorder %s27, 0
      %p115 = por %p113, %p114
      %s116 = ssub.s32 %s29, %s36
      %p117 = scmp.eq.s32.totalorder %s116, 0
      %s119 = sadd.s32 %s118, 1
      %s120 = scalar_select %p117, %s118, %s119
      %p123 = pneg %p117
      %p124 = scmp.eq.s32.totalorder %s21, 1
      %p125 = por %p123, %p124
      %p126 = scmp.ne.s32.totalorder %s118, %s121
      %p127 = scmp.eq.s32.totalorder %s21, 0
      %p128 = por %p126, %p127
      %p129 = scmp.ne.s32.totalorder %s118, %s121
      %p130 = scmp.eq.s32.totalorder %s26, 1
      %p131 = por %p129, %p130
      %p132 = scmp.ne.s32.totalorder %s121, %s122
      %p133 = scmp.eq.s32.totalorder %s26, 0
      %p134 = por %p132, %p133
      %p135 = scmp.ne.s32.totalorder %s121, %s122
      %p136 = scmp.eq.s32.totalorder %s27, 1
      %p137 = por %p135, %p136
      %p139 = scmp.ne.s32.totalorder %s122, %s138
      %p140 = scmp.eq.s32.totalorder %s27, 0
      %p141 = por %p139, %p140
      %s143 = sadd.s32 %s142, 1
      %p146 = scmp.eq.s32.totalorder %s21, 1
      %p147 = scmp.ne.s32.totalorder %s142, %s144
      %p148 = scmp.eq.s32.totalorder %s21, 0
      %p149 = por %p147, %p148
      %p150 = scmp.ne.s32.totalorder %s142, %s144
      %p151 = scmp.eq.s32.totalorder %s26, 1
      %p152 = por %p150, %p151
      %p153 = scmp.ne.s32.totalorder %s144, %s145
      %p154 = scmp.eq.s32.totalorder %s26, 0
      %p155 = por %p153, %p154
      %p156 = scmp.ne.s32.totalorder %s144, %s145
      %p157 = scmp.eq.s32.totalorder %s27, 1
      %p158 = por %p156, %p157
      %p160 = scmp.ne.s32.totalorder %s145, %s159
      %p161 = scmp.eq.s32.totalorder %s27, 0
      %p162 = por %p160, %p161
      %s164 = sadd.s32 %s163, 1
      %p167 = scmp.eq.s32.totalorder %s21, 1
      %p168 = scmp.ne.s32.totalorder %s163, %s165
      %p169 = scmp.eq.s32.totalorder %s21, 0
      %p170 = por %p168, %p169
      %p171 = scmp.ne.s32.totalorder %s163, %s165
      %p172 = scmp.eq.s32.totalorder %s26, 1
      %p173 = por %p171, %p172
      %p174 = scmp.ne.s32.totalorder %s165, %s166
      %p175 = scmp.eq.s32.totalorder %s26, 0
      %p176 = por %p174, %p175
      %p177 = scmp.ne.s32.totalorder %s165, %s166
      %p178 = scmp.eq.s32.totalorder %s27, 1
      %p179 = por %p177, %p178
      %p181 = scmp.ne.s32.totalorder %s166, %s180
      %p182 = scmp.eq.s32.totalorder %s27, 0
      %p183 = por %p181, %p182
      %s184 = ssub.s32 %s28, %s40
      %s185 = ssub.s32 %s29, %s36
      %s186 = sor.u32 %s184, %s185
      %p187 = scmp.eq.s32.totalorder %s186, 0
      %s189 = sadd.s32 %s188, 1
      %s190 = scalar_select %p187, %s188, %s189
      %p193 = pneg %p187
      %p194 = scmp.eq.s32.totalorder %s21, 1
      %p195 = por %p193, %p194
      %p196 = scmp.ne.s32.totalorder %s188, %s191
      %p197 = scmp.eq.s32.totalorder %s21, 0
      %p198 = por %p196, %p197
      %p199 = scmp.ne.s32.totalorder %s188, %s191
      %p200 = scmp.eq.s32.totalorder %s26, 1
      %p201 = por %p199, %p200
      %p202 = scmp.ne.s32.totalorder %s191, %s192
      %p203 = scmp.eq.s32.totalorder %s26, 0
      %p204 = por %p202, %p203
      %p205 = scmp.ne.s32.totalorder %s191, %s192
      %p206 = scmp.eq.s32.totalorder %s27, 1
      %p207 = por %p205, %p206
      %p209 = scmp.ne.s32.totalorder %s192, %s208
      %p210 = scmp.eq.s32.totalorder %s27, 0
      %p211 = por %p209, %p210
      %p212 = scmp.le.s32.totalorder 1, %s21
      %p213 = scmp.lt.s32.totalorder %s21, 3
      %p214 = pnand %p212, %p213
      %p215 = pneg %p214
      // Predicated region
      $region9: #{tpu_custom_call.1} parent=5 // pred_check
        _
      $region10: #{tpu_custom_call.1} parent=5 // pred_check_branch
        %217 = sbr.rel (%p214) target = $region12
      $region11: #{tpu_custom_call.1} parent=5 // pred_region
        %s218 = ssub.s32 %s21, 1
        // Predicated region
        $region13: #{tpu_custom_call.1} parent=11 // pred_check
          %p219 = pneg %p108
        $region14: #{tpu_custom_call.1} parent=11 // pred_check_branch
          %221 = sbr.rel (%p219) target = $region16
        $region15: #{tpu_custom_call.1} parent=11 // pred_region
          _
        $region16: #{tpu_custom_call.1} parent=11 // pred_fallthru
          _
        // Predicated region
        $region17: #{tpu_custom_call.1} parent=11 // pred_check
          %p222 = pneg %p134
        $region18: #{tpu_custom_call.1} parent=11 // pred_check_branch
          %224 = sbr.rel (%p222) target = $region20
        $region19: #{tpu_custom_call.1} parent=11 // pred_region
          %s225 = smul.u32 2, %s31
          %p226 = scmp.lt.s32.totalorder %s225, 1
          %s227 = scalar_select %p226, %s225, 1
          %s228 = smul.addr %s227, 8
          %s229 = scalar_lea.vmem %s3, %s228
          %s230 = smul.u32 2, %s31
        $region20: #{tpu_custom_call.1} parent=11 // pred_fallthru
          _
        // Predicated region
        $region21: #{tpu_custom_call.1} parent=11 // pred_check
          %p231 = pneg %p155
        $region22: #{tpu_custom_call.1} parent=11 // pred_check_branch
          %233 = sbr.rel (%p231) target = $region24
        $region23: #{tpu_custom_call.1} parent=11 // pred_region
          _
        $region24: #{tpu_custom_call.1} parent=11 // pred_fallthru
          _
        // Predicated region
        $region25: #{tpu_custom_call.1} parent=11 // pred_check
          %p234 = pneg %p176
        $region26: #{tpu_custom_call.1} parent=11 // pred_check_branch
          %236 = sbr.rel (%p234) target = $region28
        $region27: #{tpu_custom_call.1} parent=11 // pred_region
          _
        $region28: #{tpu_custom_call.1} parent=11 // pred_fallthru
          _
      $region12: #{tpu_custom_call.1} parent=5 // pred_fallthru
        _
      %p237 = scmp.lt.s32.totalorder %s21, 2
      // Predicated region
      $region29: #{tpu_custom_call.1} parent=5 // pred_check
        %p238 = pneg %p237
      $region30: #{tpu_custom_call.1} parent=5 // pred_check_branch
        %240 = sbr.rel (%p238) target = $region32
      $region31: #{tpu_custom_call.1} parent=5 // pred_region
        // Predicated region
        $region33: #{tpu_custom_call.1} parent=31 // pred_check
          %p241 = pneg %p53
        $region34: #{tpu_custom_call.1} parent=31 // pred_check_branch
          %243 = sbr.rel (%p241) target = $region36
        $region35: #{tpu_custom_call.1} parent=31 // pred_region
          %s244 = sand.u32 %s43, 1
          %s245 = scalar_lea.sflag [#allocation4], %s244
          %s246 = sand.u32 %s43, 1
          %s247 = smul.addr %s246, 64
          %s248 = scalar_lea.vmem [#allocation3], %s247
          %s250 = ssub.s32 1024, 1024
          %251 = vsyncadd %s245, %s250
          %s252 = smul.addr %s28, 8
          %s253 = smul.addr %s252, 128
          %s254 = scalar_lea.hbm %s0, %s253
          %s255 = sshll.u32 %s248, 4
          %s256 = int_to_ptr.vmem [resolvable:$true] %s255
          %261 = dma.hbm_to_vmem [thread:$0]  %s254, 1024, %s256, %s245, 128, 128, 8
        $region36: #{tpu_custom_call.1} parent=31 // pred_fallthru
          _
        // Predicated region
        $region37: #{tpu_custom_call.1} parent=31 // pred_check
          %p262 = pneg %p81
        $region38: #{tpu_custom_call.1} parent=31 // pred_check_branch
          %264 = sbr.rel (%p262) target = $region40
        $region39: #{tpu_custom_call.1} parent=31 // pred_region
          %s265 = sand.u32 %s71, 1
          %s266 = scalar_lea.sflag [#allocation7], %s265
          %s267 = sand.u32 %s71, 1
          %s268 = smul.addr %s267, 32
          %s269 = scalar_lea.vmem [#allocation6], %s268
          %s270 = smul.u32 2, %s29
          %s272 = ssub.s32 512, 512
          %273 = vsyncadd %s266, %s272
          %s274 = smul.addr %s28, 4
          %s275 = sadd.s32 %s270, %s274
          %s276 = smul.addr %s275, 128
          %s277 = scalar_lea.hbm %s1, %s276
          %s278 = sshll.u32 %s269, 4
          %s279 = int_to_ptr.vmem [resolvable:$true] %s278
          %284 = dma.hbm_to_vmem [thread:$0]  %s277, 512, %s279, %s266, 256, 256, 16
        $region40: #{tpu_custom_call.1} parent=31 // pred_fallthru
          _
      $region32: #{tpu_custom_call.1} parent=5 // pred_fallthru
        _
      %p285 = scmp.le.s32.totalorder 1, %s21
      %p286 = scmp.lt.s32.totalorder %s21, 3
      %p287 = pnand %p285, %p286
      %p288 = pneg %p287
      // Predicated region
      $region41: #{tpu_custom_call.1} parent=5 // pred_check
        _
      $region42: #{tpu_custom_call.1} parent=5 // pred_check_branch
        %290 = sbr.rel (%p287) target = $region44
      $region43: #{tpu_custom_call.1} parent=5 // pred_region
        %s291 = ssub.s32 %s21, 1
        %s292 = sand.u32 %s46, 1
        %s293 = scalar_lea.sflag [#allocation4], %s292
        %s294 = sand.u32 %s46, 1
        %s295 = smul.addr %s294, 64
        %s296 = scalar_lea.vmem [#allocation3], %s295
        // Predicated region
        $region45: #{tpu_custom_call.1} parent=43 // pred_check
          %p297 = pneg %p59
        $region46: #{tpu_custom_call.1} parent=43 // pred_check_branch
          %299 = sbr.rel (%p297) target = $region48
        $region47: #{tpu_custom_call.1} parent=43 // pred_region
          %300 = dma.done %s293, 1024
        $region48: #{tpu_custom_call.1} parent=43 // pred_fallthru
          _
        %s301 = sand.u32 %s74, 1
        %s302 = scalar_lea.sflag [#allocation7], %s301
        %s303 = sand.u32 %s74, 1
        %s304 = smul.addr %s303, 32
        %s305 = scalar_lea.vmem [#allocation6], %s304
        // Predicated region
        $region49: #{tpu_custom_call.1} parent=43 // pred_check
          %p306 = pneg %p87
        $region50: #{tpu_custom_call.1} parent=43 // pred_check_branch
          %308 = sbr.rel (%p306) target = $region52
        $region51: #{tpu_custom_call.1} parent=43 // pred_region
          %309 = dma.done %s302, 512
        $region52: #{tpu_custom_call.1} parent=43 // pred_fallthru
          _
        %s310 = sand.u32 %s46, 1
        %s311 = scalar_lea.sflag [#allocation4], %s310
        %s312 = sand.u32 %s46, 1
        %s313 = smul.addr %s312, 64
        %s314 = scalar_lea.vmem [#allocation3], %s313
        %p315 = pneg %p59
        %p316 = pneg %p56
        %s317 = sand.u32 %s74, 1
        %s318 = scalar_lea.sflag [#allocation7], %s317
        %s319 = sand.u32 %s74, 1
        %s320 = smul.addr %s319, 32
        %s321 = scalar_lea.vmem [#allocation6], %s320
        %p322 = pneg %p87
        %p323 = pneg %p84
        %p324 = pneg %p108
        %p325 = pneg %p105
        %s326 = smul.u32 2, %s31
        %p327 = scmp.lt.s32.totalorder %s326, 1
        %s328 = scalar_select %p327, %s326, 1
        %s329 = smul.addr %s328, 8
        %s330 = scalar_lea.vmem %s3, %s329
        %p331 = pneg %p134
        %p332 = pneg %p131
        %p333 = pneg %p155
        %p334 = pneg %p152
        %p335 = pneg %p176
        %p336 = pneg %p173
        %p337 = pneg %p204
        %p338 = pneg %p201
        %s339 = sand.u32 %s191, 1
        %s340 = scalar_lea.sflag [#allocation5], %s339
        %s341 = sand.u32 %s191, 1
        %s342 = smul.addr %s341, 16
        %s343 = scalar_lea.vmem [#allocation8], %s342
        %s344 = smul.u32 2, %s31
        %s345 = smul.u32 2, %s31
        %p346 = scmp.lt.s32.totalorder %s345, 1
        %s347 = scalar_select %p346, %s345, 1
        %s348 = smul.addr %s347, 8
        %s349 = scalar_lea.vmem %s3, %s348
        %s350 = smul.u32 2, %s31
        %s351 = smul.u32 2, %s31
        %v353 = vld [vmem:[%s296] sm:$0xff]
        %v354 = vld [vmem:[%s296 + $0x8] sm:$0xff]
        %v355 = vld [vmem:[%s296 + $0x10] sm:$0xff]
        %v356 = vld [vmem:[%s296 + $0x18] sm:$0xff]
        %v357 = vld [vmem:[%s296 + $0x20] sm:$0xff]
        %v358 = vld [vmem:[%s296 + $0x28] sm:$0xff]
        %v359 = vld [vmem:[%s296 + $0x30] sm:$0xff]
        %v360 = vld [vmem:[%s296 + $0x38] sm:$0xff]
        %v361 = vpack.c.bf16 %v353, %v353
        %v362 = vpack.c.bf16 %v354, %v354
        %v363 = vpack.c.bf16 %v355, %v355
        %v364 = vpack.c.bf16 %v356, %v356
        %v365 = vpack.c.bf16 %v357, %v357
        %v366 = vpack.c.bf16 %v358, %v358
        %v367 = vpack.c.bf16 %v359, %v359
        %v368 = vpack.c.bf16 %v360, %v360
        %v369 = vld [vmem:[%s2] sm:$0xff]
        %v370 = vpack.c.bf16 %v369, %v369
        %vm371 = vcmask 64512
        %v373 = vsel %vm371, %v361, 0
        %vm375 = vcmask 1043456
        %v377 = vsel %vm375, %v370, 0
        %379 = vmatprep.subr.bf16.mxu0 0
        %380 = vmatpush1.bf16.msra.mxu0 %v377
        %381 = vmatprep.subr.bf16.mxu0 0
        %382 = vmatpush1.bf16.msra.mxu0 0
        %383 = vmatprep.subr.bf16.mxu0 0
        %384 = vmatpush1.bf16.msra.mxu0 0
        %385 = vmatprep.subr.bf16.mxu0 0
        %386 = vmatpush1.bf16.msra.mxu0 0
        %387 = vmatprep.subr.bf16.mxu0 0
        %388 = vmatpush1.bf16.msra.mxu0 0
        %389 = vmatprep.subr.bf16.mxu0 0
        %390 = vmatpush1.bf16.msra.mxu0 0
        %391 = vmatprep.subr.bf16.mxu0 0
        %392 = vmatpush1.bf16.msra.mxu0 0
        %393 = vmatprep.subr.bf16.mxu0 0
        %394 = vmatpush1.bf16.msra.mxu0 0
        %395 = vmatprep.subr.bf16.mxu0 0
        %396 = vmatpush1.bf16.msra.mxu0 0
        %397 = vmatprep.subr.bf16.mxu0 0
        %398 = vmatpush1.bf16.msra.mxu0 0
        %399 = vmatprep.subr.bf16.mxu0 0
        %400 = vmatpush1.bf16.msra.mxu0 0
        %401 = vmatprep.subr.bf16.mxu0 0
        %402 = vmatpush1.bf16.msra.mxu0 0
        %403 = vmatprep.subr.bf16.mxu0 0
        %404 = vmatpush1.bf16.msra.mxu0 0
        %405 = vmatprep.subr.bf16.mxu0 0
        %406 = vmatpush1.bf16.msra.mxu0 0
        %407 = vmatprep.subr.bf16.mxu0 0
        %408 = vmatpush1.bf16.msra.mxu0 0
        %409 = vmatprep.subr.bf16.mxu0 0
        %410 = vmatpush1.bf16.msra.mxu0 0
        %411 = vmatprep.mubr.bf16.mxu0 0
        %412 = vmatmul.mubr.bf16.gmra.mrb[0].mxu0 %v373
        %v413 = vpop.f32.mrb[0].mxu0
        %v414 = vadd.f32 0.0, %v413
        %v415 = vpop.f32.mrb[0].mxu0
        %v416 = vpop.f32.mrb[0].mxu0
        %v417 = vpop.f32.mrb[0].mxu0
        %418 = vdwg.mxu0
        %v420 = vsel %vm371, %v362, 0
        %422 = vmatprep.subr.bf16.mxu0 0
        %423 = vmatpush1.bf16.msra.mxu0 %v377
        %424 = vmatprep.subr.bf16.mxu0 0
        %425 = vmatpush1.bf16.msra.mxu0 0
        %426 = vmatprep.subr.bf16.mxu0 0
        %427 = vmatpush1.bf16.msra.mxu0 0
        %428 = vmatprep.subr.bf16.mxu0 0
        %429 = vmatpush1.bf16.msra.mxu0 0
        %430 = vmatprep.subr.bf16.mxu0 0
        %431 = vmatpush1.bf16.msra.mxu0 0
        %432 = vmatprep.subr.bf16.mxu0 0
        %433 = vmatpush1.bf16.msra.mxu0 0
        %434 = vmatprep.subr.bf16.mxu0 0
        %435 = vmatpush1.bf16.msra.mxu0 0
        %436 = vmatprep.subr.bf16.mxu0 0
        %437 = vmatpush1.bf16.msra.mxu0 0
        %438 = vmatprep.subr.bf16.mxu0 0
        %439 = vmatpush1.bf16.msra.mxu0 0
        %440 = vmatprep.subr.bf16.mxu0 0
        %441 = vmatpush1.bf16.msra.mxu0 0
        %442 = vmatprep.subr.bf16.mxu0 0
        %443 = vmatpush1.bf16.msra.mxu0 0
        %444 = vmatprep.subr.bf16.mxu0 0
        %445 = vmatpush1.bf16.msra.mxu0 0
        %446 = vmatprep.subr.bf16.mxu0 0
        %447 = vmatpush1.bf16.msra.mxu0 0
        %448 = vmatprep.subr.bf16.mxu0 0
        %449 = vmatpush1.bf16.msra.mxu0 0
        %450 = vmatprep.subr.bf16.mxu0 0
        %451 = vmatpush1.bf16.msra.mxu0 0
        %452 = vmatprep.subr.bf16.mxu0 0
        %453 = vmatpush1.bf16.msra.mxu0 0
        %454 = vmatprep.mubr.bf16.mxu0 0
        %455 = vmatmul.mubr.bf16.gmra.mrb[0].mxu0 %v420
        %v456 = vpop.f32.mrb[0].mxu0
        %v457 = vadd.f32 0.0, %v456
        %v458 = vpop.f32.mrb[0].mxu0
        %v459 = vpop.f32.mrb[0].mxu0
        %v460 = vpop.f32.mrb[0].mxu0
        %461 = vdwg.mxu0
        %v463 = vsel %vm371, %v363, 0
        %465 = vmatprep.subr.bf16.mxu0 0
        %466 = vmatpush1.bf16.msra.mxu0 %v377
        %467 = vmatprep.subr.bf16.mxu0 0
        %468 = vmatpush1.bf16.msra.mxu0 0
        %469 = vmatprep.subr.bf16.mxu0 0
        %470 = vmatpush1.bf16.msra.mxu0 0
        %471 = vmatprep.subr.bf16.mxu0 0
        %472 = vmatpush1.bf16.msra.mxu0 0
        %473 = vmatprep.subr.bf16.mxu0 0
        %474 = vmatpush1.bf16.msra.mxu0 0
        %475 = vmatprep.subr.bf16.mxu0 0
        %476 = vmatpush1.bf16.msra.mxu0 0
        %477 = vmatprep.subr.bf16.mxu0 0
        %478 = vmatpush1.bf16.msra.mxu0 0
        %479 = vmatprep.subr.bf16.mxu0 0
        %480 = vmatpush1.bf16.msra.mxu0 0
        %481 = vmatprep.subr.bf16.mxu0 0
        %482 = vmatpush1.bf16.msra.mxu0 0
        %483 = vmatprep.subr.bf16.mxu0 0
        %484 = vmatpush1.bf16.msra.mxu0 0
        %485 = vmatprep.subr.bf16.mxu0 0
        %486 = vmatpush1.bf16.msra.mxu0 0
        %487 = vmatprep.subr.bf16.mxu0 0
        %488 = vmatpush1.bf16.msra.mxu0 0
        %489 = vmatprep.subr.bf16.mxu0 0
        %490 = vmatpush1.bf16.msra.mxu0 0
        %491 = vmatprep.subr.bf16.mxu0 0
        %492 = vmatpush1.bf16.msra.mxu0 0
        %493 = vmatprep.subr.bf16.mxu0 0
        %494 = vmatpush1.bf16.msra.mxu0 0
        %495 = vmatprep.subr.bf16.mxu0 0
        %496 = vmatpush1.bf16.msra.mxu0 0
        %497 = vmatprep.mubr.bf16.mxu0 0
        %498 = vmatmul.mubr.bf16.gmra.mrb[0].mxu0 %v463
        %v499 = vpop.f32.mrb[0].mxu0
        %v500 = vadd.f32 0.0, %v499
        %v501 = vpop.f32.mrb[0].mxu0
        %v502 = vpop.f32.mrb[0].mxu0
        %v503 = vpop.f32.mrb[0].mxu0
        %504 = vdwg.mxu0
        %v506 = vsel %vm371, %v364, 0
        %508 = vmatprep.subr.bf16.mxu0 0
        %509 = vmatpush1.bf16.msra.mxu0 %v377
        %510 = vmatprep.subr.bf16.mxu0 0
        %511 = vmatpush1.bf16.msra.mxu0 0
        %512 = vmatprep.subr.bf16.mxu0 0
        %513 = vmatpush1.bf16.msra.mxu0 0
        %514 = vmatprep.subr.bf16.mxu0 0
        %515 = vmatpush1.bf16.msra.mxu0 0
        %516 = vmatprep.subr.bf16.mxu0 0
        %517 = vmatpush1.bf16.msra.mxu0 0
        %518 = vmatprep.subr.bf16.mxu0 0
        %519 = vmatpush1.bf16.msra.mxu0 0
        %520 = vmatprep.subr.bf16.mxu0 0
        %521 = vmatpush1.bf16.msra.mxu0 0
        %522 = vmatprep.subr.bf16.mxu0 0
        %523 = vmatpush1.bf16.msra.mxu0 0
        %524 = vmatprep.subr.bf16.mxu0 0
        %525 = vmatpush1.bf16.msra.mxu0 0
        %526 = vmatprep.subr.bf16.mxu0 0
        %527 = vmatpush1.bf16.msra.mxu0 0
        %528 = vmatprep.subr.bf16.mxu0 0
        %529 = vmatpush1.bf16.msra.mxu0 0
        %530 = vmatprep.subr.bf16.mxu0 0
        %531 = vmatpush1.bf16.msra.mxu0 0
        %532 = vmatprep.subr.bf16.mxu0 0
        %533 = vmatpush1.bf16.msra.mxu0 0
        %534 = vmatprep.subr.bf16.mxu0 0
        %535 = vmatpush1.bf16.msra.mxu0 0
        %536 = vmatprep.subr.bf16.mxu0 0
        %537 = vmatpush1.bf16.msra.mxu0 0
        %538 = vmatprep.subr.bf16.mxu0 0
        %539 = vmatpush1.bf16.msra.mxu0 0
        %540 = vmatprep.mubr.bf16.mxu0 0
        %541 = vmatmul.mubr.bf16.gmra.mrb[0].mxu0 %v506
        %v542 = vpop.f32.mrb[0].mxu0
        %v543 = vadd.f32 0.0, %v542
        %v544 = vpop.f32.mrb[0].mxu0
        %v545 = vpop.f32.mrb[0].mxu0
        %v546 = vpop.f32.mrb[0].mxu0
        %547 = vdwg.mxu0
        %v549 = vsel %vm371, %v365, 0
        %551 = vmatprep.subr.bf16.mxu0 0
        %552 = vmatpush1.bf16.msra.mxu0 %v377
        %553 = vmatprep.subr.bf16.mxu0 0
        %554 = vmatpush1.bf16.msra.mxu0 0
        %555 = vmatprep.subr.bf16.mxu0 0
        %556 = vmatpush1.bf16.msra.mxu0 0
        %557 = vmatprep.subr.bf16.mxu0 0
        %558 = vmatpush1.bf16.msra.mxu0 0
        %559 = vmatprep.subr.bf16.mxu0 0
        %560 = vmatpush1.bf16.msra.mxu0 0
        %561 = vmatprep.subr.bf16.mxu0 0
        %562 = vmatpush1.bf16.msra.mxu0 0
        %563 = vmatprep.subr.bf16.mxu0 0
        %564 = vmatpush1.bf16.msra.mxu0 0
        %565 = vmatprep.subr.bf16.mxu0 0
        %566 = vmatpush1.bf16.msra.mxu0 0
        %567 = vmatprep.subr.bf16.mxu0 0
        %568 = vmatpush1.bf16.msra.mxu0 0
        %569 = vmatprep.subr.bf16.mxu0 0
        %570 = vmatpush1.bf16.msra.mxu0 0
        %571 = vmatprep.subr.bf16.mxu0 0
        %572 = vmatpush1.bf16.msra.mxu0 0
        %573 = vmatprep.subr.bf16.mxu0 0
        %574 = vmatpush1.bf16.msra.mxu0 0
        %575 = vmatprep.subr.bf16.mxu0 0
        %576 = vmatpush1.bf16.msra.mxu0 0
        %577 = vmatprep.subr.bf16.mxu0 0
        %578 = vmatpush1.bf16.msra.mxu0 0
        %579 = vmatprep.subr.bf16.mxu0 0
        %580 = vmatpush1.bf16.msra.mxu0 0
        %581 = vmatprep.subr.bf16.mxu0 0
        %582 = vmatpush1.bf16.msra.mxu0 0
        %583 = vmatprep.mubr.bf16.mxu0 0
        %584 = vmatmul.mubr.bf16.gmra.mrb[0].mxu0 %v549
        %v585 = vpop.f32.mrb[0].mxu0
        %v586 = vadd.f32 0.0, %v585
        %v587 = vpop.f32.mrb[0].mxu0
        %v588 = vpop.f32.mrb[0].mxu0
        %v589 = vpop.f32.mrb[0].mxu0
        %590 = vdwg.mxu0
        %v592 = vsel %vm371, %v366, 0
        %594 = vmatprep.subr.bf16.mxu0 0
        %595 = vmatpush1.bf16.msra.mxu0 %v377
        %596 = vmatprep.subr.bf16.mxu0 0
        %597 = vmatpush1.bf16.msra.mxu0 0
        %598 = vmatprep.subr.bf16.mxu0 0
        %599 = vmatpush1.bf16.msra.mxu0 0
        %600 = vmatprep.subr.bf16.mxu0 0
        %601 = vmatpush1.bf16.msra.mxu0 0
        %602 = vmatprep.subr.bf16.mxu0 0
        %603 = vmatpush1.bf16.msra.mxu0 0
        %604 = vmatprep.subr.bf16.mxu0 0
        %605 = vmatpush1.bf16.msra.mxu0 0
        %606 = vmatprep.subr.bf16.mxu0 0
        %607 = vmatpush1.bf16.msra.mxu0 0
        %608 = vmatprep.subr.bf16.mxu0 0
        %609 = vmatpush1.bf16.msra.mxu0 0
        %610 = vmatprep.subr.bf16.mxu0 0
        %611 = vmatpush1.bf16.msra.mxu0 0
        %612 = vmatprep.subr.bf16.mxu0 0
        %613 = vmatpush1.bf16.msra.mxu0 0
        %614 = vmatprep.subr.bf16.mxu0 0
        %615 = vmatpush1.bf16.msra.mxu0 0
        %616 = vmatprep.subr.bf16.mxu0 0
        %617 = vmatpush1.bf16.msra.mxu0 0
        %618 = vmatprep.subr.bf16.mxu0 0
        %619 = vmatpush1.bf16.msra.mxu0 0
        %620 = vmatprep.subr.bf16.mxu0 0
        %621 = vmatpush1.bf16.msra.mxu0 0
        %622 = vmatprep.subr.bf16.mxu0 0
        %623 = vmatpush1.bf16.msra.mxu0 0
        %624 = vmatprep.subr.bf16.mxu0 0
        %625 = vmatpush1.bf16.msra.mxu0 0
        %626 = vmatprep.mubr.bf16.mxu0 0
        %627 = vmatmul.mubr.bf16.gmra.mrb[0].mxu0 %v592
        %v628 = vpop.f32.mrb[0].mxu0
        %v629 = vadd.f32 0.0, %v628
        %v630 = vpop.f32.mrb[0].mxu0
        %v631 = vpop.f32.mrb[0].mxu0
        %v632 = vpop.f32.mrb[0].mxu0
        %633 = vdwg.mxu0
        %v635 = vsel %vm371, %v367, 0
        %637 = vmatprep.subr.bf16.mxu0 0
        %638 = vmatpush1.bf16.msra.mxu0 %v377
        %639 = vmatprep.subr.bf16.mxu0 0
        %640 = vmatpush1.bf16.msra.mxu0 0
        %641 = vmatprep.subr.bf16.mxu0 0
        %642 = vmatpush1.bf16.msra.mxu0 0
        %643 = vmatprep.subr.bf16.mxu0 0
        %644 = vmatpush1.bf16.msra.mxu0 0
        %645 = vmatprep.subr.bf16.mxu0 0
        %646 = vmatpush1.bf16.msra.mxu0 0
        %647 = vmatprep.subr.bf16.mxu0 0
        %648 = vmatpush1.bf16.msra.mxu0 0
        %649 = vmatprep.subr.bf16.mxu0 0
        %650 = vmatpush1.bf16.msra.mxu0 0
        %651 = vmatprep.subr.bf16.mxu0 0
        %652 = vmatpush1.bf16.msra.mxu0 0
        %653 = vmatprep.subr.bf16.mxu0 0
        %654 = vmatpush1.bf16.msra.mxu0 0
        %655 = vmatprep.subr.bf16.mxu0 0
        %656 = vmatpush1.bf16.msra.mxu0 0
        %657 = vmatprep.subr.bf16.mxu0 0
        %658 = vmatpush1.bf16.msra.mxu0 0
        %659 = vmatprep.subr.bf16.mxu0 0
        %660 = vmatpush1.bf16.msra.mxu0 0
        %661 = vmatprep.subr.bf16.mxu0 0
        %662 = vmatpush1.bf16.msra.mxu0 0
        %663 = vmatprep.subr.bf16.mxu0 0
        %664 = vmatpush1.bf16.msra.mxu0 0
        %665 = vmatprep.subr.bf16.mxu0 0
        %666 = vmatpush1.bf16.msra.mxu0 0
        %667 = vmatprep.subr.bf16.mxu0 0
        %668 = vmatpush1.bf16.msra.mxu0 0
        %669 = vmatprep.mubr.bf16.mxu0 0
        %670 = vmatmul.mubr.bf16.gmra.mrb[0].mxu0 %v635
        %v671 = vpop.f32.mrb[0].mxu0
        %v672 = vadd.f32 0.0, %v671
        %v673 = vpop.f32.mrb[0].mxu0
        %v674 = vpop.f32.mrb[0].mxu0
        %v675 = vpop.f32.mrb[0].mxu0
        %676 = vdwg.mxu0
        %v678 = vsel %vm371, %v368, 0
        %680 = vmatprep.subr.bf16.mxu0 0
        %681 = vmatpush1.bf16.msra.mxu0 %v377
        %682 = vmatprep.subr.bf16.mxu0 0
        %683 = vmatpush1.bf16.msra.mxu0 0
        %684 = vmatprep.subr.bf16.mxu0 0
        %685 = vmatpush1.bf16.msra.mxu0 0
        %686 = vmatprep.subr.bf16.mxu0 0
        %687 = vmatpush1.bf16.msra.mxu0 0
        %688 = vmatprep.subr.bf16.mxu0 0
        %689 = vmatpush1.bf16.msra.mxu0 0
        %690 = vmatprep.subr.bf16.mxu0 0
        %691 = vmatpush1.bf16.msra.mxu0 0
        %692 = vmatprep.subr.bf16.mxu0 0
        %693 = vmatpush1.bf16.msra.mxu0 0
        %694 = vmatprep.subr.bf16.mxu0 0
        %695 = vmatpush1.bf16.msra.mxu0 0
        %696 = vmatprep.subr.bf16.mxu0 0
        %697 = vmatpush1.bf16.msra.mxu0 0
        %698 = vmatprep.subr.bf16.mxu0 0
        %699 = vmatpush1.bf16.msra.mxu0 0
        %700 = vmatprep.subr.bf16.mxu0 0
        %701 = vmatpush1.bf16.msra.mxu0 0
        %702 = vmatprep.subr.bf16.mxu0 0
        %703 = vmatpush1.bf16.msra.mxu0 0
        %704 = vmatprep.subr.bf16.mxu0 0
        %705 = vmatpush1.bf16.msra.mxu0 0
        %706 = vmatprep.subr.bf16.mxu0 0
        %707 = vmatpush1.bf16.msra.mxu0 0
        %708 = vmatprep.subr.bf16.mxu0 0
        %709 = vmatpush1.bf16.msra.mxu0 0
        %710 = vmatprep.subr.bf16.mxu0 0
        %711 = vmatpush1.bf16.msra.mxu0 0
        %712 = vmatprep.mubr.bf16.mxu0 0
        %713 = vmatmul.mubr.bf16.gmra.mrb[0].mxu0 %v678
        %v714 = vpop.f32.mrb[0].mxu0
        %v715 = vadd.f32 0.0, %v714
        %v716 = vpop.f32.mrb[0].mxu0
        %v717 = vpop.f32.mrb[0].mxu0
        %v718 = vpop.f32.mrb[0].mxu0
        %719 = vdwg.mxu0
        %v720 = vld [vmem:[%s349] sm:$0xff]
        %v721 = vld [vmem:[%s349 + $0x8] sm:$0xff]
        %v722 = vpack.c.bf16 %v721, %v720
        %v723 = vpack.c.bf16 %v414, %v414
        %v724 = vpack.c.bf16 %v457, %v457
        %v725 = vpack.c.bf16 %v500, %v500
        %v726 = vpack.c.bf16 %v543, %v543
        %v727 = vpack.c.bf16 %v586, %v586
        %v728 = vpack.c.bf16 %v629, %v629
        %v729 = vpack.c.bf16 %v672, %v672
        %v730 = vpack.c.bf16 %v715, %v715
        %v732 = vsel %vm371, %v722, 0
        %v735 = vsel %vm375, %v723, 0
        %737 = vmatprep.subr.bf16.mxu0 0
        %738 = vmatpush1.bf16.msra.mxu0 %v735
        %739 = vmatprep.subr.bf16.mxu0 0
        %740 = vmatpush1.bf16.msra.mxu0 0
        %741 = vmatprep.subr.bf16.mxu0 0
        %742 = vmatpush1.bf16.msra.mxu0 0
        %743 = vmatprep.subr.bf16.mxu0 0
        %744 = vmatpush1.bf16.msra.mxu0 0
        %745 = vmatprep.subr.bf16.mxu0 0
        %746 = vmatpush1.bf16.msra.mxu0 0
        %747 = vmatprep.subr.bf16.mxu0 0
        %748 = vmatpush1.bf16.msra.mxu0 0
        %749 = vmatprep.subr.bf16.mxu0 0
        %750 = vmatpush1.bf16.msra.mxu0 0
        %751 = vmatprep.subr.bf16.mxu0 0
        %752 = vmatpush1.bf16.msra.mxu0 0
        %753 = vmatprep.subr.bf16.mxu0 0
        %754 = vmatpush1.bf16.msra.mxu0 0
        %755 = vmatprep.subr.bf16.mxu0 0
        %756 = vmatpush1.bf16.msra.mxu0 0
        %757 = vmatprep.subr.bf16.mxu0 0
        %758 = vmatpush1.bf16.msra.mxu0 0
        %759 = vmatprep.subr.bf16.mxu0 0
        %760 = vmatpush1.bf16.msra.mxu0 0
        %761 = vmatprep.subr.bf16.mxu0 0
        %762 = vmatpush1.bf16.msra.mxu0 0
        %763 = vmatprep.subr.bf16.mxu0 0
        %764 = vmatpush1.bf16.msra.mxu0 0
        %765 = vmatprep.subr.bf16.mxu0 0
        %766 = vmatpush1.bf16.msra.mxu0 0
        %767 = vmatprep.subr.bf16.mxu0 0
        %768 = vmatpush1.bf16.msra.mxu0 0
        %769 = vmatprep.mubr.bf16.mxu0 0
        %770 = vmatmul.mubr.bf16.gmra.mrb[0].mxu0 %v732
        %v771 = vpop.f32.mrb[0].mxu0
        %v772 = vadd.f32 0.0, %v771
        %v773 = vpop.f32.mrb[0].mxu0
        %v774 = vpop.f32.mrb[0].mxu0
        %v775 = vadd.f32 0.0, %v774
        %v776 = vpop.f32.mrb[0].mxu0
        %777 = vdwg.mxu0
        %v779 = vsel %vm375, %v724, 0
        %781 = vmatprep.subr.bf16.mxu0 0
        %782 = vmatpush1.bf16.msra.mxu0 %v779
        %783 = vmatprep.subr.bf16.mxu0 0
        %784 = vmatpush1.bf16.msra.mxu0 0
        %785 = vmatprep.subr.bf16.mxu0 0
        %786 = vmatpush1.bf16.msra.mxu0 0
        %787 = vmatprep.subr.bf16.mxu0 0
        %788 = vmatpush1.bf16.msra.mxu0 0
        %789 = vmatprep.subr.bf16.mxu0 0
        %790 = vmatpush1.bf16.msra.mxu0 0
        %791 = vmatprep.subr.bf16.mxu0 0
        %792 = vmatpush1.bf16.msra.mxu0 0
        %793 = vmatprep.subr.bf16.mxu0 0
        %794 = vmatpush1.bf16.msra.mxu0 0
        %795 = vmatprep.subr.bf16.mxu0 0
        %796 = vmatpush1.bf16.msra.mxu0 0
        %797 = vmatprep.subr.bf16.mxu0 0
        %798 = vmatpush1.bf16.msra.mxu0 0
        %799 = vmatprep.subr.bf16.mxu0 0
        %800 = vmatpush1.bf16.msra.mxu0 0
        %801 = vmatprep.subr.bf16.mxu0 0
        %802 = vmatpush1.bf16.msra.mxu0 0
        %803 = vmatprep.subr.bf16.mxu0 0
        %804 = vmatpush1.bf16.msra.mxu0 0
        %805 = vmatprep.subr.bf16.mxu0 0
        %806 = vmatpush1.bf16.msra.mxu0 0
        %807 = vmatprep.subr.bf16.mxu0 0
        %808 = vmatpush1.bf16.msra.mxu0 0
        %809 = vmatprep.subr.bf16.mxu0 0
        %810 = vmatpush1.bf16.msra.mxu0 0
        %811 = vmatprep.subr.bf16.mxu0 0
        %812 = vmatpush1.bf16.msra.mxu0 0
        %813 = vmatprep.mubr.bf16.mxu0 0
        %814 = vmatmul.mubr.bf16.gmra.mrb[0].mxu0 %v732
        %v815 = vpop.f32.mrb[0].mxu0
        %v816 = vadd.f32 0.0, %v815
        %v817 = vpop.f32.mrb[0].mxu0
        %v818 = vpop.f32.mrb[0].mxu0
        %v819 = vadd.f32 0.0, %v818
        %v820 = vpop.f32.mrb[0].mxu0
        %821 = vdwg.mxu0
        %v823 = vsel %vm375, %v725, 0
        %825 = vmatprep.subr.bf16.mxu0 0
        %826 = vmatpush1.bf16.msra.mxu0 %v823
        %827 = vmatprep.subr.bf16.mxu0 0
        %828 = vmatpush1.bf16.msra.mxu0 0
        %829 = vmatprep.subr.bf16.mxu0 0
        %830 = vmatpush1.bf16.msra.mxu0 0
        %831 = vmatprep.subr.bf16.mxu0 0
        %832 = vmatpush1.bf16.msra.mxu0 0
        %833 = vmatprep.subr.bf16.mxu0 0
        %834 = vmatpush1.bf16.msra.mxu0 0
        %835 = vmatprep.subr.bf16.mxu0 0
        %836 = vmatpush1.bf16.msra.mxu0 0
        %837 = vmatprep.subr.bf16.mxu0 0
        %838 = vmatpush1.bf16.msra.mxu0 0
        %839 = vmatprep.subr.bf16.mxu0 0
        %840 = vmatpush1.bf16.msra.mxu0 0
        %841 = vmatprep.subr.bf16.mxu0 0
        %842 = vmatpush1.bf16.msra.mxu0 0
        %843 = vmatprep.subr.bf16.mxu0 0
        %844 = vmatpush1.bf16.msra.mxu0 0
        %845 = vmatprep.subr.bf16.mxu0 0
        %846 = vmatpush1.bf16.msra.mxu0 0
        %847 = vmatprep.subr.bf16.mxu0 0
        %848 = vmatpush1.bf16.msra.mxu0 0
        %849 = vmatprep.subr.bf16.mxu0 0
        %850 = vmatpush1.bf16.msra.mxu0 0
        %851 = vmatprep.subr.bf16.mxu0 0
        %852 = vmatpush1.bf16.msra.mxu0 0
        %853 = vmatprep.subr.bf16.mxu0 0
        %854 = vmatpush1.bf16.msra.mxu0 0
        %855 = vmatprep.subr.bf16.mxu0 0
        %856 = vmatpush1.bf16.msra.mxu0 0
        %857 = vmatprep.mubr.bf16.mxu0 0
        %858 = vmatmul.mubr.bf16.gmra.mrb[0].mxu0 %v732
        %v859 = vpop.f32.mrb[0].mxu0
        %v860 = vadd.f32 0.0, %v859
        %v861 = vpop.f32.mrb[0].mxu0
        %v862 = vpop.f32.mrb[0].mxu0
        %v863 = vadd.f32 0.0, %v862
        %v864 = vpop.f32.mrb[0].mxu0
        %865 = vdwg.mxu0
        %v867 = vsel %vm375, %v726, 0
        %869 = vmatprep.subr.bf16.mxu0 0
        %870 = vmatpush1.bf16.msra.mxu0 %v867
        %871 = vmatprep.subr.bf16.mxu0 0
        %872 = vmatpush1.bf16.msra.mxu0 0
        %873 = vmatprep.subr.bf16.mxu0 0
        %874 = vmatpush1.bf16.msra.mxu0 0
        %875 = vmatprep.subr.bf16.mxu0 0
        %876 = vmatpush1.bf16.msra.mxu0 0
        %877 = vmatprep.subr.bf16.mxu0 0
        %878 = vmatpush1.bf16.msra.mxu0 0
        %879 = vmatprep.subr.bf16.mxu0 0
        %880 = vmatpush1.bf16.msra.mxu0 0
        %881 = vmatprep.subr.bf16.mxu0 0
        %882 = vmatpush1.bf16.msra.mxu0 0
        %883 = vmatprep.subr.bf16.mxu0 0
        %884 = vmatpush1.bf16.msra.mxu0 0
        %885 = vmatprep.subr.bf16.mxu0 0
        %886 = vmatpush1.bf16.msra.mxu0 0
        %887 = vmatprep.subr.bf16.mxu0 0
        %888 = vmatpush1.bf16.msra.mxu0 0
        %889 = vmatprep.subr.bf16.mxu0 0
        %890 = vmatpush1.bf16.msra.mxu0 0
        %891 = vmatprep.subr.bf16.mxu0 0
        %892 = vmatpush1.bf16.msra.mxu0 0
        %893 = vmatprep.subr.bf16.mxu0 0
        %894 = vmatpush1.bf16.msra.mxu0 0
        %895 = vmatprep.subr.bf16.mxu0 0
        %896 = vmatpush1.bf16.msra.mxu0 0
        %897 = vmatprep.subr.bf16.mxu0 0
        %898 = vmatpush1.bf16.msra.mxu0 0
        %899 = vmatprep.subr.bf16.mxu0 0
        %900 = vmatpush1.bf16.msra.mxu0 0
        %901 = vmatprep.mubr.bf16.mxu0 0
        %902 = vmatmul.mubr.bf16.gmra.mrb[0].mxu0 %v732
        %v903 = vpop.f32.mrb[0].mxu0
        %v904 = vadd.f32 0.0, %v903
        %v905 = vpop.f32.mrb[0].mxu0
        %v906 = vpop.f32.mrb[0].mxu0
        %v907 = vadd.f32 0.0, %v906
        %v908 = vpop.f32.mrb[0].mxu0
        %909 = vdwg.mxu0
        %v911 = vsel %vm375, %v727, 0
        %913 = vmatprep.subr.bf16.mxu0 0
        %914 = vmatpush1.bf16.msra.mxu0 %v911
        %915 = vmatprep.subr.bf16.mxu0 0
        %916 = vmatpush1.bf16.msra.mxu0 0
        %917 = vmatprep.subr.bf16.mxu0 0
        %918 = vmatpush1.bf16.msra.mxu0 0
        %919 = vmatprep.subr.bf16.mxu0 0
        %920 = vmatpush1.bf16.msra.mxu0 0
        %921 = vmatprep.subr.bf16.mxu0 0
        %922 = vmatpush1.bf16.msra.mxu0 0
        %923 = vmatprep.subr.bf16.mxu0 0
        %924 = vmatpush1.bf16.msra.mxu0 0
        %925 = vmatprep.subr.bf16.mxu0 0
        %926 = vmatpush1.bf16.msra.mxu0 0
        %927 = vmatprep.subr.bf16.mxu0 0
        %928 = vmatpush1.bf16.msra.mxu0 0
        %929 = vmatprep.subr.bf16.mxu0 0
        %930 = vmatpush1.bf16.msra.mxu0 0
        %931 = vmatprep.subr.bf16.mxu0 0
        %932 = vmatpush1.bf16.msra.mxu0 0
        %933 = vmatprep.subr.bf16.mxu0 0
        %934 = vmatpush1.bf16.msra.mxu0 0
        %935 = vmatprep.subr.bf16.mxu0 0
        %936 = vmatpush1.bf16.msra.mxu0 0
        %937 = vmatprep.subr.bf16.mxu0 0
        %938 = vmatpush1.bf16.msra.mxu0 0
        %939 = vmatprep.subr.bf16.mxu0 0
        %940 = vmatpush1.bf16.msra.mxu0 0
        %941 = vmatprep.subr.bf16.mxu0 0
        %942 = vmatpush1.bf16.msra.mxu0 0
        %943 = vmatprep.subr.bf16.mxu0 0
        %944 = vmatpush1.bf16.msra.mxu0 0
        %945 = vmatprep.mubr.bf16.mxu0 0
        %946 = vmatmul.mubr.bf16.gmra.mrb[0].mxu0 %v732
        %v947 = vpop.f32.mrb[0].mxu0
        %v948 = vadd.f32 0.0, %v947
        %v949 = vpop.f32.mrb[0].mxu0
        %v950 = vpop.f32.mrb[0].mxu0
        %v951 = vadd.f32 0.0, %v950
        %v952 = vpop.f32.mrb[0].mxu0
        %953 = vdwg.mxu0
        %v955 = vsel %vm375, %v728, 0
        %957 = vmatprep.subr.bf16.mxu0 0
        %958 = vmatpush1.bf16.msra.mxu0 %v955
        %959 = vmatprep.subr.bf16.mxu0 0
        %960 = vmatpush1.bf16.msra.mxu0 0
        %961 = vmatprep.subr.bf16.mxu0 0
        %962 = vmatpush1.bf16.msra.mxu0 0
        %963 = vmatprep.subr.bf16.mxu0 0
        %964 = vmatpush1.bf16.msra.mxu0 0
        %965 = vmatprep.subr.bf16.mxu0 0
        %966 = vmatpush1.bf16.msra.mxu0 0
        %967 = vmatprep.subr.bf16.mxu0 0
        %968 = vmatpush1.bf16.msra.mxu0 0
        %969 = vmatprep.subr.bf16.mxu0 0
        %970 = vmatpush1.bf16.msra.mxu0 0
        %971 = vmatprep.subr.bf16.mxu0 0
        %972 = vmatpush1.bf16.msra.mxu0 0
        %973 = vmatprep.subr.bf16.mxu0 0
        %974 = vmatpush1.bf16.msra.mxu0 0
        %975 = vmatprep.subr.bf16.mxu0 0
        %976 = vmatpush1.bf16.msra.mxu0 0
        %977 = vmatprep.subr.bf16.mxu0 0
        %978 = vmatpush1.bf16.msra.mxu0 0
        %979 = vmatprep.subr.bf16.mxu0 0
        %980 = vmatpush1.bf16.msra.mxu0 0
        %981 = vmatprep.subr.bf16.mxu0 0
        %982 = vmatpush1.bf16.msra.mxu0 0
        %983 = vmatprep.subr.bf16.mxu0 0
        %984 = vmatpush1.bf16.msra.mxu0 0
        %985 = vmatprep.subr.bf16.mxu0 0
        %986 = vmatpush1.bf16.msra.mxu0 0
        %987 = vmatprep.subr.bf16.mxu0 0
        %988 = vmatpush1.bf16.msra.mxu0 0
        %989 = vmatprep.mubr.bf16.mxu0 0
        %990 = vmatmul.mubr.bf16.gmra.mrb[0].mxu0 %v732
        %v991 = vpop.f32.mrb[0].mxu0
        %v992 = vadd.f32 0.0, %v991
        %v993 = vpop.f32.mrb[0].mxu0
        %v994 = vpop.f32.mrb[0].mxu0
        %v995 = vadd.f32 0.0, %v994
        %v996 = vpop.f32.mrb[0].mxu0
        %997 = vdwg.mxu0
        %v999 = vsel %vm375, %v729, 0
        %1001 = vmatprep.subr.bf16.mxu0 0
        %1002 = vmatpush1.bf16.msra.mxu0 %v999
        %1003 = vmatprep.subr.bf16.mxu0 0
        %1004 = vmatpush1.bf16.msra.mxu0 0
        %1005 = vmatprep.subr.bf16.mxu0 0
        %1006 = vmatpush1.bf16.msra.mxu0 0
        %1007 = vmatprep.subr.bf16.mxu0 0
        %1008 = vmatpush1.bf16.msra.mxu0 0
        %1009 = vmatprep.subr.bf16.mxu0 0
        %1010 = vmatpush1.bf16.msra.mxu0 0
        %1011 = vmatprep.subr.bf16.mxu0 0
        %1012 = vmatpush1.bf16.msra.mxu0 0
        %1013 = vmatprep.subr.bf16.mxu0 0
        %1014 = vmatpush1.bf16.msra.mxu0 0
        %1015 = vmatprep.subr.bf16.mxu0 0
        %1016 = vmatpush1.bf16.msra.mxu0 0
        %1017 = vmatprep.subr.bf16.mxu0 0
        %1018 = vmatpush1.bf16.msra.mxu0 0
        %1019 = vmatprep.subr.bf16.mxu0 0
        %1020 = vmatpush1.bf16.msra.mxu0 0
        %1021 = vmatprep.subr.bf16.mxu0 0
        %1022 = vmatpush1.bf16.msra.mxu0 0
        %1023 = vmatprep.subr.bf16.mxu0 0
        %1024 = vmatpush1.bf16.msra.mxu0 0
        %1025 = vmatprep.subr.bf16.mxu0 0
        %1026 = vmatpush1.bf16.msra.mxu0 0
        %1027 = vmatprep.subr.bf16.mxu0 0
        %1028 = vmatpush1.bf16.msra.mxu0 0
        %1029 = vmatprep.subr.bf16.mxu0 0
        %1030 = vmatpush1.bf16.msra.mxu0 0
        %1031 = vmatprep.subr.bf16.mxu0 0
        %1032 = vmatpush1.bf16.msra.mxu0 0
        %1033 = vmatprep.mubr.bf16.mxu0 0
        %1034 = vmatmul.mubr.bf16.gmra.mrb[0].mxu0 %v732
        %v1035 = vpop.f32.mrb[0].mxu0
        %v1036 = vadd.f32 0.0, %v1035
        %v1037 = vpop.f32.mrb[0].mxu0
        %v1038 = vpop.f32.mrb[0].mxu0
        %v1039 = vadd.f32 0.0, %v1038
        %v1040 = vpop.f32.mrb[0].mxu0
        %1041 = vdwg.mxu0
        %v1043 = vsel %vm375, %v730, 0
        %1045 = vmatprep.subr.bf16.mxu0 0
        %1046 = vmatpush1.bf16.msra.mxu0 %v1043
        %1047 = vmatprep.subr.bf16.mxu0 0
        %1048 = vmatpush1.bf16.msra.mxu0 0
        %1049 = vmatprep.subr.bf16.mxu0 0
        %1050 = vmatpush1.bf16.msra.mxu0 0
        %1051 = vmatprep.subr.bf16.mxu0 0
        %1052 = vmatpush1.bf16.msra.mxu0 0
        %1053 = vmatprep.subr.bf16.mxu0 0
        %1054 = vmatpush1.bf16.msra.mxu0 0
        %1055 = vmatprep.subr.bf16.mxu0 0
        %1056 = vmatpush1.bf16.msra.mxu0 0
        %1057 = vmatprep.subr.bf16.mxu0 0
        %1058 = vmatpush1.bf16.msra.mxu0 0
        %1059 = vmatprep.subr.bf16.mxu0 0
        %1060 = vmatpush1.bf16.msra.mxu0 0
        %1061 = vmatprep.subr.bf16.mxu0 0
        %1062 = vmatpush1.bf16.msra.mxu0 0
        %1063 = vmatprep.subr.bf16.mxu0 0
        %1064 = vmatpush1.bf16.msra.mxu0 0
        %1065 = vmatprep.subr.bf16.mxu0 0
        %1066 = vmatpush1.bf16.msra.mxu0 0
        %1067 = vmatprep.subr.bf16.mxu0 0
        %1068 = vmatpush1.bf16.msra.mxu0 0
        %1069 = vmatprep.subr.bf16.mxu0 0
        %1070 = vmatpush1.bf16.msra.mxu0 0
        %1071 = vmatprep.subr.bf16.mxu0 0
        %1072 = vmatpush1.bf16.msra.mxu0 0
        %1073 = vmatprep.subr.bf16.mxu0 0
        %1074 = vmatpush1.bf16.msra.mxu0 0
        %1075 = vmatprep.subr.bf16.mxu0 0
        %1076 = vmatpush1.bf16.msra.mxu0 0
        %1077 = vmatprep.mubr.bf16.mxu0 0
        %1078 = vmatmul.mubr.bf16.gmra.mrb[0].mxu0 %v732
        %v1079 = vpop.f32.mrb[0].mxu0
        %v1080 = vadd.f32 0.0, %v1079
        %v1081 = vpop.f32.mrb[0].mxu0
        %v1082 = vpop.f32.mrb[0].mxu0
        %v1083 = vadd.f32 0.0, %v1082
        %v1084 = vpop.f32.mrb[0].mxu0
        %1085 = vdwg.mxu0
        %v1086 = vpack.c.bf16 %v775, %v772
        %v1087 = vpack.c.bf16 %v819, %v816
        %v1088 = vpack.c.bf16 %v863, %v860
        %v1089 = vpack.c.bf16 %v907, %v904
        %v1090 = vpack.c.bf16 %v951, %v948
        %v1091 = vpack.c.bf16 %v995, %v992
        %v1092 = vpack.c.bf16 %v1039, %v1036
        %v1093 = vpack.c.bf16 %v1083, %v1080
        %v1096 = vpack.i.b16 %v1087, %v1086
        %v1098 = vshrl.u32 %v1086, 16
        %v1099 = vshrl.u32 %v1087, 16
        %v1100 = vpack.i.b16 %v1099, %v1098
        %v1104 = vpack.i.b16 %v1089, %v1088
        %v1106 = vshrl.u32 %v1088, 16
        %v1107 = vshrl.u32 %v1089, 16
        %v1108 = vpack.i.b16 %v1107, %v1106
        %v1112 = vpack.i.b16 %v1091, %v1090
        %v1114 = vshrl.u32 %v1090, 16
        %v1115 = vshrl.u32 %v1091, 16
        %v1116 = vpack.i.b16 %v1115, %v1114
        %v1120 = vpack.i.b16 %v1093, %v1092
        %v1122 = vshrl.u32 %v1092, 16
        %v1123 = vshrl.u32 %v1093, 16
        %v1124 = vpack.i.b16 %v1123, %v1122
        %v1126 = vcombine.low %v1096, %v1112
        %v1127 = vcombine.high %v1096, %v1112
        %v1129 = vunpack.c.l.s4 1983009808
        %v1130 = vunpack.c.0.s8 %v1129
        %v1131 = vlaneseq
        %v1132 = vshrl.u32 %v1131, 7
        %v1133 = vsub.s32 %v1130, %v1132
        %v1134 = vrot.slane %v1126, %v1133
        %v1136 = vunpack.c.l.s4 1983009808
        %v1137 = vunpack.c.0.s8 %v1136
        %v1138 = vlaneseq
        %v1139 = vshrl.u32 %v1138, 7
        %v1140 = vsub.s32 %v1137, %v1139
        %v1141 = vrot.slane %v1127, %v1140
        %v1142 = vcombine.low %v1104, %v1120
        %v1143 = vcombine.high %v1104, %v1120
        %v1145 = vunpack.c.l.s4 1983009808
        %v1146 = vunpack.c.0.s8 %v1145
        %v1147 = vlaneseq
        %v1148 = vshrl.u32 %v1147, 7
        %v1149 = vsub.s32 %v1146, %v1148
        %v1150 = vrot.slane %v1142, %v1149
        %v1152 = vunpack.c.l.s4 1983009808
        %v1153 = vunpack.c.0.s8 %v1152
        %v1154 = vlaneseq
        %v1155 = vshrl.u32 %v1154, 7
        %v1156 = vsub.s32 %v1153, %v1155
        %v1157 = vrot.slane %v1143, %v1156
        %v1158 = vcombine.low %v1134, %v1150
        %v1159 = vcombine.high %v1134, %v1150
        %v1161 = vunpack.c.l.s4 1934713408
        %v1162 = vunpack.c.0.s8 %v1161
        %v1163 = vlaneseq
        %v1164 = vshrl.u32 %v1163, 7
        %v1165 = vsub.s32 %v1162, %v1164
        %v1166 = vrot.slane %v1158, %v1165
        %v1168 = vunpack.c.l.s4 1934713408
        %v1169 = vunpack.c.0.s8 %v1168
        %v1170 = vlaneseq
        %v1171 = vshrl.u32 %v1170, 7
        %v1172 = vsub.s32 %v1169, %v1171
        %v1173 = vrot.slane %v1159, %v1172
        %v1174 = vcombine.low %v1141, %v1157
        %v1175 = vcombine.high %v1141, %v1157
        %v1177 = vunpack.c.l.s4 1934713408
        %v1178 = vunpack.c.0.s8 %v1177
        %v1179 = vlaneseq
        %v1180 = vshrl.u32 %v1179, 7
        %v1181 = vsub.s32 %v1178, %v1180
        %v1182 = vrot.slane %v1174, %v1181
        %v1184 = vunpack.c.l.s4 1934713408
        %v1185 = vunpack.c.0.s8 %v1184
        %v1186 = vlaneseq
        %v1187 = vshrl.u32 %v1186, 7
        %v1188 = vsub.s32 %v1185, %v1187
        %v1189 = vrot.slane %v1175, %v1188
        %v1190 = vcombine.high %v1166, 0
        %v1191 = vcombine.high %v1173, 0
        %v1192 = vcombine.high %v1182, 0
        %v1193 = vcombine.high %v1189, 0
        %v1194 = vcombine.low %v1100, %v1116
        %v1195 = vcombine.high %v1100, %v1116
        %v1197 = vunpack.c.l.s4 1983009808
        %v1198 = vunpack.c.0.s8 %v1197
        %v1199 = vlaneseq
        %v1200 = vshrl.u32 %v1199, 7
        %v1201 = vsub.s32 %v1198, %v1200
        %v1202 = vrot.slane %v1194, %v1201
        %v1204 = vunpack.c.l.s4 1983009808
        %v1205 = vunpack.c.0.s8 %v1204
        %v1206 = vlaneseq
        %v1207 = vshrl.u32 %v1206, 7
        %v1208 = vsub.s32 %v1205, %v1207
        %v1209 = vrot.slane %v1195, %v1208
        %v1210 = vcombine.low %v1108, %v1124
        %v1211 = vcombine.high %v1108, %v1124
        %v1213 = vunpack.c.l.s4 1983009808
        %v1214 = vunpack.c.0.s8 %v1213
        %v1215 = vlaneseq
        %v1216 = vshrl.u32 %v1215, 7
        %v1217 = vsub.s32 %v1214, %v1216
        %v1218 = vrot.slane %v1210, %v1217
        %v1220 = vunpack.c.l.s4 1983009808
        %v1221 = vunpack.c.0.s8 %v1220
        %v1222 = vlaneseq
        %v1223 = vshrl.u32 %v1222, 7
        %v1224 = vsub.s32 %v1221, %v1223
        %v1225 = vrot.slane %v1211, %v1224
        %v1226 = vcombine.low %v1202, %v1218
        %v1227 = vcombine.high %v1202, %v1218
        %v1229 = vunpack.c.l.s4 1934713408
        %v1230 = vunpack.c.0.s8 %v1229
        %v1231 = vlaneseq
        %v1232 = vshrl.u32 %v1231, 7
        %v1233 = vsub.s32 %v1230, %v1232
        %v1234 = vrot.slane %v1226, %v1233
        %v1236 = vunpack.c.l.s4 1934713408
        %v1237 = vunpack.c.0.s8 %v1236
        %v1238 = vlaneseq
        %v1239 = vshrl.u32 %v1238, 7
        %v1240 = vsub.s32 %v1237, %v1239
        %v1241 = vrot.slane %v1227, %v1240
        %v1242 = vcombine.low %v1209, %v1225
        %v1243 = vcombine.high %v1209, %v1225
        %v1245 = vunpack.c.l.s4 1934713408
        %v1246 = vunpack.c.0.s8 %v1245
        %v1247 = vlaneseq
        %v1248 = vshrl.u32 %v1247, 7
        %v1249 = vsub.s32 %v1246, %v1248
        %v1250 = vrot.slane %v1242, %v1249
        %v1252 = vunpack.c.l.s4 1934713408
        %v1253 = vunpack.c.0.s8 %v1252
        %v1254 = vlaneseq
        %v1255 = vshrl.u32 %v1254, 7
        %v1256 = vsub.s32 %v1253, %v1255
        %v1257 = vrot.slane %v1243, %v1256
        %v1258 = vcombine.high %v1234, 0
        %v1259 = vcombine.high %v1241, 0
        %v1260 = vcombine.high %v1250, 0
        %v1261 = vcombine.high %v1257, 0
        %1263 = vrot.lane.b32.xlu0 %v1234, 16
        %v1264 = vpop.permute.xlu0 %1263
        %1266 = vrot.lane.b32.xlu0 %v1190, 32
        %v1267 = vpop.permute.xlu0 %1266
        %1269 = vrot.lane.b32.xlu0 %v1258, 48
        %v1270 = vpop.permute.xlu0 %1269
        %1272 = vrot.lane.b32.xlu0 %v1173, 64
        %v1273 = vpop.permute.xlu0 %1272
        %1275 = vrot.lane.b32.xlu0 %v1241, 80
        %v1276 = vpop.permute.xlu0 %1275
        %1278 = vrot.lane.b32.xlu0 %v1191, 96
        %v1279 = vpop.permute.xlu0 %1278
        %1281 = vrot.lane.b32.xlu0 %v1259, 112
        %v1282 = vpop.permute.xlu0 %1281
        %1284 = vrot.lane.b32.xlu0 %v1250, 16
        %v1285 = vpop.permute.xlu0 %1284
        %1287 = vrot.lane.b32.xlu0 %v1192, 32
        %v1288 = vpop.permute.xlu0 %1287
        %1290 = vrot.lane.b32.xlu0 %v1260, 48
        %v1291 = vpop.permute.xlu0 %1290
        %1293 = vrot.lane.b32.xlu0 %v1189, 64
        %v1294 = vpop.permute.xlu0 %1293
        %1296 = vrot.lane.b32.xlu0 %v1257, 80
        %v1297 = vpop.permute.xlu0 %1296
        %1299 = vrot.lane.b32.xlu0 %v1193, 96
        %v1300 = vpop.permute.xlu0 %1299
        %1302 = vrot.lane.b32.xlu0 %v1261, 112
        %v1303 = vpop.permute.xlu0 %1302
        %vm1304 = vcmask 130048
        %v1307 = vsel %vm1304, %v1166, %v1264
        %vm1308 = vcmask 261120
        %v1310 = vsel %vm1308, %v1307, %v1267
        %vm1311 = vcmask 392192
        %v1313 = vsel %vm1311, %v1310, %v1270
        %vm1314 = vcmask 523264
        %v1316 = vsel %vm1314, %v1313, %v1273
        %vm1317 = vcmask 654336
        %v1319 = vsel %vm1317, %v1316, %v1276
        %vm1320 = vcmask 785408
        %v1322 = vsel %vm1320, %v1319, %v1279
        %vm1323 = vcmask 916480
        %v1325 = vsel %vm1323, %v1322, %v1282
        %v1328 = vsel %vm1304, %v1182, %v1285
        %v1330 = vsel %vm1308, %v1328, %v1288
        %v1332 = vsel %vm1311, %v1330, %v1291
        %v1334 = vsel %vm1314, %v1332, %v1294
        %v1336 = vsel %vm1317, %v1334, %v1297
        %v1338 = vsel %vm1320, %v1336, %v1300
        %v1340 = vsel %vm1323, %v1338, %v1303
        %v1343 = vunpack.c.l.b16 %v1325
        %v1344 = vunpack.c.l.b16 %v1340
        %v1345 = vpack.c.b16 %v1344, %v1343
        %1347 = vst [vmem:[#allocation2] sm:$0xff] %v1345
        %v1348 = vld [vmem:[%s305] sm:$0xff]
        %v1349 = vld [vmem:[%s305 + $0x8] sm:$0xff]
        %v1350 = vld [vmem:[%s305 + $0x10] sm:$0xff]
        %v1351 = vld [vmem:[%s305 + $0x18] sm:$0xff]
        %v1352 = vpack.c.bf16 %v1350, %v1348
        %v1353 = vpack.c.bf16 %v1351, %v1349
        %v1356 = vunpack.c.l.b16 %v1352
        %v1357 = vunpack.c.l.b16 %v1353
        %v1358 = vunpack.c.h.b16 %v1352
        %v1359 = vunpack.c.h.b16 %v1353
        %v1360 = vpack.c.b16 %v1357, %v1356
        %v1361 = vpack.c.b16 %v1359, %v1358
        %1364 = vst [vmem:[#allocation2 + $0x8] sm:$0xff] %v1360
        %1365 = vst [vmem:[#allocation2 + $0x10] sm:$0xff] %v1361
        %v1366 = vld [vmem:[%s4] sm:$0xf]
        %v1367 = vld [vmem:[%s4 + $0x4] sm:$0xf]
        %v1368 = vld [vmem:[#allocation2] sm:$0xff]
        %v1369 = vld [vmem:[#allocation2 + $0x8] sm:$0xff]
        %v1370 = vld [vmem:[#allocation2 + $0x10] sm:$0xff]
        %v1371 = vld [vmem:[%s5] sm:$0xff]
        %v1372 = vld [vmem:[%s5 + $0x8] sm:$0xff]
        %1374 = vset.pattern.permute.xlu0 0
        %1375 = vperm.xlu0 %1374, %v1371
        %v1376 = vpop.permute.xlu0 %1375
        %1379 = vset.pattern.permute.xlu0 0
        %1380 = vperm.xlu0 %1379, %v1372
        %v1381 = vpop.permute.xlu0 %1380
        %v1385 = vunpack.c.l.b16 %v1366
        %v1386 = vunpack.c.l.b16 %v1367
        %v1387 = vpack.c.b16 %v1386, %v1385
        %v1391 = vunpack.c.l.b16 %v1368
        %v1392 = vunpack.c.h.b16 %v1368
        %v1393 = vunpack.c.l.b16 %v1369
        %v1394 = vunpack.c.h.b16 %v1369
        %v1395 = vunpack.c.l.b16 %v1370
        %v1396 = vunpack.c.h.b16 %v1370
        %v1397 = vpack.c.b16 %v1393, %v1391
        %v1398 = vpack.c.b16 %v1394, %v1392
        %v1399 = vpack.c.b16 %v1395, %v1395
        %v1400 = vpack.c.b16 %v1396, %v1396
        %vm1403 = vcmask 195584
        %v1405 = vsel %vm1403, %v1387, 0
        %v1408 = vsel %vm375, %v1399, 0
        %v1411 = vsel %vm375, %v1400, 0
        %1413 = vmatprep.subr.bf16.mxu0 %v1398
        %1414 = vmatpush1.bf16.msra.mxu0 %v1397
        %1415 = vmatprep.subr.bf16.mxu0 %v1411
        %1416 = vmatpush1.bf16.msra.mxu0 %v1408
        %1417 = vmatprep.subr.bf16.mxu0 0
        %1418 = vmatpush1.bf16.msra.mxu0 0
        %1419 = vmatprep.subr.bf16.mxu0 0
        %1420 = vmatpush1.bf16.msra.mxu0 0
        %1421 = vmatprep.subr.bf16.mxu0 0
        %1422 = vmatpush1.bf16.msra.mxu0 0
        %1423 = vmatprep.subr.bf16.mxu0 0
        %1424 = vmatpush1.bf16.msra.mxu0 0
        %1425 = vmatprep.subr.bf16.mxu0 0
        %1426 = vmatpush1.bf16.msra.mxu0 0
        %1427 = vmatprep.subr.bf16.mxu0 0
        %1428 = vmatpush1.bf16.msra.mxu0 0
        %1429 = vmatprep.subr.bf16.mxu0 0
        %1430 = vmatpush1.bf16.msra.mxu0 0
        %1431 = vmatprep.subr.bf16.mxu0 0
        %1432 = vmatpush1.bf16.msra.mxu0 0
        %1433 = vmatprep.subr.bf16.mxu0 0
        %1434 = vmatpush1.bf16.msra.mxu0 0
        %1435 = vmatprep.subr.bf16.mxu0 0
        %1436 = vmatpush1.bf16.msra.mxu0 0
        %1437 = vmatprep.subr.bf16.mxu0 0
        %1438 = vmatpush1.bf16.msra.mxu0 0
        %1439 = vmatprep.subr.bf16.mxu0 0
        %1440 = vmatpush1.bf16.msra.mxu0 0
        %1441 = vmatprep.subr.bf16.mxu0 0
        %1442 = vmatpush1.bf16.msra.mxu0 0
        %1443 = vmatprep.subr.bf16.mxu0 0
        %1444 = vmatpush1.bf16.msra.mxu0 0
        %1445 = vmatprep.mubr.bf16.mxu0 0
        %1446 = vmatmul.mubr.bf16.gmra.mrb[0].mxu0 %v1405
        %v1447 = vpop.f32.mrb[0].mxu0
        %v1448 = vadd.f32 %v1376, %v1447
        %v1449 = vpop.f32.mrb[0].mxu0
        %v1450 = vadd.f32 %v1376, %v1449
        %v1451 = vpop.f32.mrb[0].mxu0
        %v1452 = vadd.f32 %v1381, %v1451
        %v1453 = vpop.f32.mrb[0].mxu0
        %v1454 = vadd.f32 %v1381, %v1453
        %1455 = vdwg.mxu0
        %v1456 = vpack.c.bf16 %v1452, %v1448
        %v1457 = vpack.c.bf16 %v1454, %v1450
        %v1460 = vunpack.c.l.b16 %v1456
        %v1461 = vunpack.c.l.b16 %v1457
        %v1462 = vunpack.c.h.b16 %v1456
        %v1463 = vunpack.c.h.b16 %v1457
        %v1464 = vpack.c.b16 %v1461, %v1460
        %v1465 = vpack.c.b16 %v1463, %v1462
        %1468 = vst [vmem:[%s343] sm:$0xff] %v1464
        %1469 = vst [vmem:[%s343 + $0x8] sm:$0xff] %v1465
        %s1470 = sand.u32 %s191, 1
        %s1471 = scalar_lea.sflag [#allocation5], %s1470
        %s1472 = sand.u32 %s191, 1
        %s1473 = smul.addr %s1472, 16
        %s1474 = scalar_lea.vmem [#allocation8], %s1473
        // Predicated region
        $region53: #{tpu_custom_call.1} parent=43 // pred_check
          %p1475 = pneg %p201
        $region54: #{tpu_custom_call.1} parent=43 // pred_check_branch
          %1477 = sbr.rel (%p1475) target = $region56
        $region55: #{tpu_custom_call.1} parent=43 // pred_region
          %s1478 = smul.u32 2, %s31
          %s1480 = ssub.s32 256, 256
          %1481 = vsyncadd %s1471, %s1480
          %s1482 = smul.addr %s30, 4
          %s1483 = sadd.s32 %s1478, %s1482
          %s1484 = smul.addr %s1483, 64
          %s1485 = scalar_lea.hbm %s6, %s1484
          %s1486 = sshll.u32 %s1474, 4
          %s1487 = int_to_ptr.vmem [resolvable:$true] %s1486
          %1492 = dma.vmem_to_hbm [thread:$0]  %s1487, 256, %s1485, %s1471, 128, 128, 8
        $region56: #{tpu_custom_call.1} parent=43 // pred_fallthru
          _
      $region44: #{tpu_custom_call.1} parent=5 // pred_fallthru
        _
      %p1493 = scmp.le.s32.totalorder 2, %s21
      // Predicated region
      $region57: #{tpu_custom_call.1} parent=5 // pred_check
        %p1494 = pneg %p1493
      $region58: #{tpu_custom_call.1} parent=5 // pred_check_branch
        %1496 = sbr.rel (%p1494) target = $region60
      $region59: #{tpu_custom_call.1} parent=5 // pred_region
        %s1497 = ssub.s32 %s21, 2
        // Predicated region
        $region61: #{tpu_custom_call.1} parent=59 // pred_check
          %p1498 = pneg %p207
        $region62: #{tpu_custom_call.1} parent=59 // pred_check_branch
          %1500 = sbr.rel (%p1498) target = $region64
        $region63: #{tpu_custom_call.1} parent=59 // pred_region
          %s1501 = sand.u32 %s192, 1
          %s1502 = scalar_lea.sflag [#allocation5], %s1501
          %s1503 = sand.u32 %s192, 1
          %s1504 = smul.addr %s1503, 16
          %s1505 = scalar_lea.vmem [#allocation8], %s1504
          %1506 = dma.done %s1502, 256
        $region64: #{tpu_custom_call.1} parent=59 // pred_fallthru
          _
      $region60: #{tpu_custom_call.1} parent=5 // pred_fallthru
        _
    $region6: #{tpu_custom_call.1} parent=1 // loop_footer
      %s25 = sadd.s32 1, %s21
    $region7: #{tpu_custom_call.1} parent=1 // loop_footer_branch
      %20 = sbr.rel target = $region3
    $region8: #{tpu_custom_call.1} parent=1 // loop_exit
      _
    %1507 = vsyncpa [#allocation4], 1
    %s1508 = scalar_lea.sflag [#allocation4], 1
    %1509 = vsyncpa %s1508, 1
    %1510 = vsyncpa [#allocation7], 1
    %s1511 = scalar_lea.sflag [#allocation7], 1
    %1512 = vsyncpa %s1511, 1
    %1513 = vsyncpa [#allocation5], 1
    %s1514 = scalar_lea.sflag [#allocation5], 1
    %1515 = vsyncpa %s1514, 1

</llo_original>
